<compile_context>
chip_gen: v5e
topology: v5e:2x2
jax: 0.10.0
libtpu: 0.0.40
codegen_flags: <defaults>
</compile_context>

<pallas_src>
import functools

import jax
import jax.numpy as jnp
from jax.experimental import pallas as pl
from jax.experimental.pallas import tpu as pltpu

# ---- config (BertConfig-equivalent, small) ----
HIDDEN = 32
N_HEADS = 4
HEAD_DIM = HIDDEN // N_HEADS
INTERMEDIATE = 64
LN_EPS = 1e-12


# ----------------------------- in-kernel helpers -----------------------------

def _layer_norm(y, g, b, eps):
    mu = jnp.mean(y, axis=-1, keepdims=True)
    var = jnp.mean(jnp.square(y - mu), axis=-1, keepdims=True)
    return (y - mu) * jax.lax.rsqrt(var + eps) * g + b


def _gelu_exact(x):
    # Exact (erf-based) GELU. erf is evaluated via Abramowitz & Stegun 7.1.26
    # (|err| < 1.5e-7, i.e. at f32 epsilon) so it lowers with only exp/VPU ops.
    # TODO(synk): switch to jax.lax.erf once Mosaic erf lowering is confirmed on all targets.
    z = x * 0.7071067811865476
    sgn = jnp.where(z >= 0.0, 1.0, -1.0)
    a = jnp.abs(z)
    t = 1.0 / (1.0 + 0.3275911 * a)
    poly = t * (0.254829592 + t * (-0.284496736 + t * (1.421413741
              + t * (-1.453152027 + t * 1.061405429))))
    erf = sgn * (1.0 - poly * jnp.exp(-a * a))
    return 0.5 * x * (1.0 + erf)


def _mha(q, k, v, bias, scale):
    """Multi-head attention on VMEM-resident values.

    q: (Sq, H), k/v: (Sk, H), bias: (Sq, Sk) additive mask or None.
    Heads are contiguous HEAD_DIM lane chunks; the loop is a static Python unroll.
    """
    outs = []
    for h in range(N_HEADS):
        lo = h * HEAD_DIM
        qh = q[:, lo:lo + HEAD_DIM]          # (Sq, Dh)
        kh = k[:, lo:lo + HEAD_DIM]          # (Sk, Dh)
        vh = v[:, lo:lo + HEAD_DIM]          # (Sk, Dh)
        # q @ k^T without materializing a transpose.
        s = jax.lax.dot_general(qh, kh, (((1,), (1,)), ((), ())),
                                preferred_element_type=jnp.float32) * scale
        if bias is not None:
            s = s + bias
        s = s - jnp.max(s, axis=-1, keepdims=True)
        p = jnp.exp(s)
        p = p * pl.reciprocal(jnp.sum(p, axis=-1, keepdims=True), approx=True)
        outs.append(jnp.dot(p, vh, preferred_element_type=jnp.float32))
    return jnp.concatenate(outs, axis=-1)    # (Sq, H)


# ----------------------------- fused decoder-layer kernel -----------------------------

def _decoder_layer_kernel(
    hs_ref, enc_ref, bias_ref,
    # self-attention
    wqkv1_ref, bqkv1_ref, wo1_ref, bo1_ref, g1_ref, b1_ref,
    # cross-attention
    wq2_ref, bq2_ref, wkv2_ref, bkv2_ref, wo2_ref, bo2_ref, g2_ref, b2_ref,
    # feed-forward
    wi_ref, bi_ref, wo3_ref, bo3_ref, g3_ref, b3_ref,
    # output
    out_ref,
    *, scale, eps,
):
    x = hs_ref[...]                                   # (Sq, H) decoder hidden states
    enc = enc_ref[...]                                # (Sk, H) encoder hidden states
    cross_bias = bias_ref[...]                        # (Sq, Sk) additive encoder mask

    # ---- self-attention (no mask) + output projection + residual LayerNorm ----
    qkv = jnp.dot(x, wqkv1_ref[...], preferred_element_type=jnp.float32) + bqkv1_ref[...]
    q = qkv[:, 0:HIDDEN]
    k = qkv[:, HIDDEN:2 * HIDDEN]
    v = qkv[:, 2 * HIDDEN:3 * HIDDEN]
    ctx = _mha(q, k, v, None, scale)
    attn1 = _layer_norm(
        jnp.dot(ctx, wo1_ref[...], preferred_element_type=jnp.float32) + bo1_ref[...] + x,
        g1_ref[...], b1_ref[...], eps)

    # ---- cross-attention (encoder mask) + output projection + residual LayerNorm ----
    q2 = jnp.dot(attn1, wq2_ref[...], preferred_element_type=jnp.float32) + bq2_ref[...]
    kv2 = jnp.dot(enc, wkv2_ref[...], preferred_element_type=jnp.float32) + bkv2_ref[...]
    k2 = kv2[:, 0:HIDDEN]
    v2 = kv2[:, HIDDEN:2 * HIDDEN]
    ctx2 = _mha(q2, k2, v2, cross_bias, scale)
    attn2 = _layer_norm(
        jnp.dot(ctx2, wo2_ref[...], preferred_element_type=jnp.float32) + bo2_ref[...] + attn1,
        g2_ref[...], b2_ref[...], eps)

    # ---- feed-forward: dense -> GELU -> dense -> residual LayerNorm ----
    inter = _gelu_exact(
        jnp.dot(attn2, wi_ref[...], preferred_element_type=jnp.float32) + bi_ref[...])
    out = _layer_norm(
        jnp.dot(inter, wo3_ref[...], preferred_element_type=jnp.float32) + bo3_ref[...] + attn2,
        g3_ref[...], b3_ref[...], eps)

    out_ref[...] = out


# ----------------------------- wrapper -----------------------------

def decoder_layer(params, hidden_states, encoder_hidden_states, encoder_attention_mask):
    B, Sq, H = hidden_states.shape
    _, Sk, _ = encoder_hidden_states.shape
    hs2d = hidden_states.reshape(B * Sq, H)
    enc2d = encoder_hidden_states.reshape(B * Sk, H)

    # --- extended encoder attention mask (mirrors the torch branching) ---
    m = encoder_attention_mask.astype(jnp.float32)
    if m.ndim == 3:
        ext = m
    elif m.ndim == 2:
        ext = m[:, None, :]
    else:
        raise ValueError(
            "Wrong shape for encoder_attention_mask (shape {})".format(m.shape))
    cross_bias = jnp.broadcast_to((1.0 - ext) * -10000.0, (B, Sq, Sk))

    scale = 1.0 / float(HEAD_DIM) ** 0.5
    kern = functools.partial(_decoder_layer_kernel, scale=scale, eps=LN_EPS)

    def weight_spec(shape):
        # Full-array block, same block index for every program -> fetched once.
        return pl.BlockSpec(shape, lambda b, _n=len(shape): (0,) * _n)

    p = params
    weights = [
        p["wqkv1"], p["bqkv1"], p["wo1"], p["bo1"], p["g1"], p["b1"],
        p["wq2"], p["bq2"], p["wkv2"], p["bkv2"], p["wo2"], p["bo2"], p["g2"], p["b2"],
        p["wi"], p["bi"], p["wo3"], p["bo3"], p["g3"], p["b3"],
    ]

    in_specs = [
        pl.BlockSpec((Sq, H), lambda b: (b, 0)),            # decoder rows of this batch
        pl.BlockSpec((Sk, H), lambda b: (b, 0)),            # encoder rows of this batch
        pl.BlockSpec((None, Sq, Sk), lambda b: (b, 0, 0)),  # additive mask (leading dim squeezed)
    ] + [weight_spec(w.shape) for w in weights]

    out2d = pl.pallas_call(
        kern,
        out_shape=jax.ShapeDtypeStruct((B * Sq, H), jnp.float32),
        grid=(B,),
        in_specs=in_specs,
        out_specs=pl.BlockSpec((Sq, H), lambda b: (b, 0)),
        compiler_params=pltpu.CompilerParams(dimension_semantics=("parallel",)),
    )(hs2d, enc2d, cross_bias, *weights)

    return out2d.reshape(B, Sq, H)


# ----------------------------- params -----------------------------

def init_params(key):
    ks = iter(jax.random.split(key, 40))

    def lin(fan_in, fan_out):
        w = jax.random.normal(next(ks), (fan_in, fan_out), jnp.float32) * 0.02
        b = jax.random.normal(next(ks), (1, fan_out), jnp.float32) * 0.02
        return w, b

    # self-attention
    wq1, bq1 = lin(HIDDEN, HIDDEN)
    wk1, bk1 = lin(HIDDEN, HIDDEN)
    wv1, bv1 = lin(HIDDEN, HIDDEN)
    wo1, bo1 = lin(HIDDEN, HIDDEN)
    # cross-attention
    wq2, bq2 = lin(HIDDEN, HIDDEN)
    wk2, bk2 = lin(HIDDEN, HIDDEN)
    wv2, bv2 = lin(HIDDEN, HIDDEN)
    wo2, bo2 = lin(HIDDEN, HIDDEN)
    # feed-forward
    wi, bi = lin(HIDDEN, INTERMEDIATE)
    wo3, bo3 = lin(INTERMEDIATE, HIDDEN)

    ones = jnp.ones((1, HIDDEN), jnp.float32)
    zeros = jnp.zeros((1, HIDDEN), jnp.float32)

    return dict(
        wqkv1=jnp.concatenate([wq1, wk1, wv1], axis=1),
        bqkv1=jnp.concatenate([bq1, bk1, bv1], axis=1),
        wo1=wo1, bo1=bo1, g1=ones, b1=zeros,
        wq2=wq2, bq2=bq2,
        wkv2=jnp.concatenate([wk2, wv2], axis=1),
        bkv2=jnp.concatenate([bk2, bv2], axis=1),
        wo2=wo2, bo2=bo2, g2=ones, b2=zeros,
        wi=wi, bi=bi, wo3=wo3, bo3=bo3, g3=ones, b3=zeros,
    )


# ----------------------------- main -----------------------------

if __name__ == "__main__":
    key = jax.random.PRNGKey(0)
    kp, kh, ke = jax.random.split(key, 3)
    params = init_params(kp)

    B, S_DEC, S_ENC = 2, 8, 16
    hidden_states = jax.random.normal(kh, (B, S_DEC, HIDDEN), jnp.float32)
    encoder_hidden_states = jax.random.normal(ke, (B, S_ENC, HIDDEN), jnp.float32)
    encoder_attention_mask = jnp.ones((B, S_ENC), jnp.float32).at[:, S_ENC - 4:].set(0.0)

    fwd = jax.jit(decoder_layer)
    out = fwd(params, hidden_states, encoder_hidden_states, encoder_attention_mask)
    out = jax.block_until_ready(out)

    assert out.shape == (B, S_DEC, HIDDEN), out.shape
    assert bool(jnp.all(jnp.isfinite(out)))
    print("KERNEL_OK")
</pallas_src>

<mosaic_0001>
module attributes {stable_mosaic.version = 11 : i64} {
  func.func @_decoder_layer_kernel(%arg0: i32, %arg1: memref<8x32xf32, #tpu.memory_space<vmem>>, %arg2: memref<16x32xf32, #tpu.memory_space<vmem>>, %arg3: memref<1x8x16xf32, #tpu.memory_space<vmem>>, %arg4: memref<32x96xf32, #tpu.memory_space<vmem>>, %arg5: memref<1x96xf32, #tpu.memory_space<vmem>>, %arg6: memref<32x32xf32, #tpu.memory_space<vmem>>, %arg7: memref<1x32xf32, #tpu.memory_space<vmem>>, %arg8: memref<1x32xf32, #tpu.memory_space<vmem>>, %arg9: memref<1x32xf32, #tpu.memory_space<vmem>>, %arg10: memref<32x32xf32, #tpu.memory_space<vmem>>, %arg11: memref<1x32xf32, #tpu.memory_space<vmem>>, %arg12: memref<32x64xf32, #tpu.memory_space<vmem>>, %arg13: memref<1x64xf32, #tpu.memory_space<vmem>>, %arg14: memref<32x32xf32, #tpu.memory_space<vmem>>, %arg15: memref<1x32xf32, #tpu.memory_space<vmem>>, %arg16: memref<1x32xf32, #tpu.memory_space<vmem>>, %arg17: memref<1x32xf32, #tpu.memory_space<vmem>>, %arg18: memref<32x64xf32, #tpu.memory_space<vmem>>, %arg19: memref<1x64xf32, #tpu.memory_space<vmem>>, %arg20: memref<64x32xf32, #tpu.memory_space<vmem>>, %arg21: memref<1x32xf32, #tpu.memory_space<vmem>>, %arg22: memref<1x32xf32, #tpu.memory_space<vmem>>, %arg23: memref<1x32xf32, #tpu.memory_space<vmem>>, %arg24: memref<8x32xf32, #tpu.memory_space<vmem>>) attributes {dimension_semantics = [#tpu.dimension_semantics<parallel>], iteration_bounds = array<i64: 2>, scalar_prefetch = 0 : i64, scratch_operands = 0 : i64, tpu.core_type = #tpu.core_type<tc>, window_params = [{transform_indices = @transform_0, window_bounds = array<i64: 8, 32>}, {transform_indices = @transform_1, window_bounds = array<i64: 16, 32>}, {transform_indices = @transform_2, window_bounds = array<i64: 1, 8, 16>}, {pipeline_mode = #tpu.pipeline_mode<synchronous>, transform_indices = @transform_3, window_bounds = array<i64: 32, 96>}, {pipeline_mode = #tpu.pipeline_mode<synchronous>, transform_indices = @transform_4, window_bounds = array<i64: 1, 96>}, {pipeline_mode = #tpu.pipeline_mode<synchronous>, transform_indices = @transform_5, window_bounds = array<i64: 32, 32>}, {pipeline_mode = #tpu.pipeline_mode<synchronous>, transform_indices = @transform_6, window_bounds = array<i64: 1, 32>}, {pipeline_mode = #tpu.pipeline_mode<synchronous>, transform_indices = @transform_7, window_bounds = array<i64: 1, 32>}, {pipeline_mode = #tpu.pipeline_mode<synchronous>, transform_indices = @transform_8, window_bounds = array<i64: 1, 32>}, {pipeline_mode = #tpu.pipeline_mode<synchronous>, transform_indices = @transform_9, window_bounds = array<i64: 32, 32>}, {pipeline_mode = #tpu.pipeline_mode<synchronous>, transform_indices = @transform_10, window_bounds = array<i64: 1, 32>}, {pipeline_mode = #tpu.pipeline_mode<synchronous>, transform_indices = @transform_11, window_bounds = array<i64: 32, 64>}, {pipeline_mode = #tpu.pipeline_mode<synchronous>, transform_indices = @transform_12, window_bounds = array<i64: 1, 64>}, {pipeline_mode = #tpu.pipeline_mode<synchronous>, transform_indices = @transform_13, window_bounds = array<i64: 32, 32>}, {pipeline_mode = #tpu.pipeline_mode<synchronous>, transform_indices = @transform_14, window_bounds = array<i64: 1, 32>}, {pipeline_mode = #tpu.pipeline_mode<synchronous>, transform_indices = @transform_15, window_bounds = array<i64: 1, 32>}, {pipeline_mode = #tpu.pipeline_mode<synchronous>, transform_indices = @transform_16, window_bounds = array<i64: 1, 32>}, {pipeline_mode = #tpu.pipeline_mode<synchronous>, transform_indices = @transform_17, window_bounds = array<i64: 32, 64>}, {pipeline_mode = #tpu.pipeline_mode<synchronous>, transform_indices = @transform_18, window_bounds = array<i64: 1, 64>}, {pipeline_mode = #tpu.pipeline_mode<synchronous>, transform_indices = @transform_19, window_bounds = array<i64: 64, 32>}, {pipeline_mode = #tpu.pipeline_mode<synchronous>, transform_indices = @transform_20, window_bounds = array<i64: 1, 32>}, {pipeline_mode = #tpu.pipeline_mode<synchronous>, transform_indices = @transform_21, window_bounds = array<i64: 1, 32>}, {pipeline_mode = #tpu.pipeline_mode<synchronous>, transform_indices = @transform_22, window_bounds = array<i64: 1, 32>}, {transform_indices = @transform_23, window_bounds = array<i64: 8, 32>}]} {
    %c0 = arith.constant 0 : index
    %c0_0 = arith.constant 0 : index
    %0 = vector.load %arg1[%c0, %c0_0] : memref<8x32xf32, #tpu.memory_space<vmem>>, vector<8x32xf32>
    %c0_1 = arith.constant 0 : index
    %c0_2 = arith.constant 0 : index
    %1 = vector.load %arg2[%c0_1, %c0_2] : memref<16x32xf32, #tpu.memory_space<vmem>>, vector<16x32xf32>
    %c0_3 = arith.constant 0 : index
    %c0_4 = arith.constant 0 : index
    %c0_5 = arith.constant 0 : index
    %2 = vector.load %arg3[%c0_3, %c0_4, %c0_5] : memref<1x8x16xf32, #tpu.memory_space<vmem>>, vector<1x8x16xf32>
    %3 = vector.shape_cast %2 : vector<1x8x16xf32> to vector<8x16xf32>
    %c0_6 = arith.constant 0 : index
    %c0_7 = arith.constant 0 : index
    %4 = vector.load %arg4[%c0_6, %c0_7] : memref<32x96xf32, #tpu.memory_space<vmem>>, vector<32x96xf32>
    %cst = arith.constant dense<0.000000e+00> : vector<8x96xf32>
    %5 = tpu.matmul %0, %4, %cst {dimension_numbers = #tpu.dot_dimension_numbers<[1], [0], [0], [1], [0, 0, 1, 1], [], []>} : vector<8x32xf32>, vector<32x96xf32>, vector<8x96xf32> -> vector<8x96xf32>
    %c0_8 = arith.constant 0 : index
    %c0_9 = arith.constant 0 : index
    %6 = vector.load %arg5[%c0_8, %c0_9] : memref<1x96xf32, #tpu.memory_space<vmem>>, vector<1x96xf32>
    %7 = vector.broadcast %6 : vector<1x96xf32> to vector<8x96xf32>
    %8 = arith.addf %5, %7 : vector<8x96xf32>
    %9 = vector.extract_strided_slice %8 {offsets = [0, 0], sizes = [8, 32], strides = [1, 1]} : vector<8x96xf32> to vector<8x32xf32>
    %10 = vector.extract_strided_slice %8 {offsets = [0, 32], sizes = [8, 32], strides = [1, 1]} : vector<8x96xf32> to vector<8x32xf32>
    %11 = vector.extract_strided_slice %8 {offsets = [0, 64], sizes = [8, 32], strides = [1, 1]} : vector<8x96xf32> to vector<8x32xf32>
    %12 = vector.extract_strided_slice %9 {offsets = [0, 0], sizes = [8, 8], strides = [1, 1]} : vector<8x32xf32> to vector<8x8xf32>
    %13 = vector.extract_strided_slice %10 {offsets = [0, 0], sizes = [8, 8], strides = [1, 1]} : vector<8x32xf32> to vector<8x8xf32>
    %14 = vector.extract_strided_slice %11 {offsets = [0, 0], sizes = [8, 8], strides = [1, 1]} : vector<8x32xf32> to vector<8x8xf32>
    %cst_10 = arith.constant dense<0.000000e+00> : vector<8x8xf32>
    %15 = tpu.matmul %12, %13, %cst_10 {dimension_numbers = #tpu.dot_dimension_numbers<[1], [1], [0], [0], [0, 0, 1, 0], [], []>} : vector<8x8xf32>, vector<8x8xf32>, vector<8x8xf32> -> vector<8x8xf32>
    %cst_11 = arith.constant 0.353553385 : f32
    %16 = vector.broadcast %cst_11 : f32 to vector<8x8xf32>
    %17 = arith.mulf %15, %16 : vector<8x8xf32>
    %cst_12 = arith.constant dense<0xFF800000> : vector<8xf32>
    %18 = vector.multi_reduction <maximumf>, %17, %cst_12 [1] : vector<8x8xf32> to vector<8xf32>
    %19 = vector.shape_cast %18 : vector<8xf32> to vector<8x1xf32>
    %20 = vector.broadcast %19 : vector<8x1xf32> to vector<8x8xf32>
    %21 = arith.subf %17, %20 : vector<8x8xf32>
    %22 = math.exp %21 : vector<8x8xf32>
    %cst_13 = arith.constant dense<0.000000e+00> : vector<8xf32>
    %23 = vector.multi_reduction <add>, %22, %cst_13 [1] : vector<8x8xf32> to vector<8xf32>
    %24 = vector.shape_cast %23 : vector<8xf32> to vector<8x1xf32>
    %25 = tpu.reciprocal %24 {approx = true} : vector<8x1xf32> -> vector<8x1xf32>
    %26 = vector.broadcast %25 : vector<8x1xf32> to vector<8x8xf32>
    %27 = arith.mulf %22, %26 : vector<8x8xf32>
    %cst_14 = arith.constant dense<0.000000e+00> : vector<8x8xf32>
    %28 = tpu.matmul %27, %14, %cst_14 {dimension_numbers = #tpu.dot_dimension_numbers<[1], [0], [0], [1], [0, 0, 1, 1], [], []>} : vector<8x8xf32>, vector<8x8xf32>, vector<8x8xf32> -> vector<8x8xf32>
    %29 = vector.extract_strided_slice %9 {offsets = [0, 8], sizes = [8, 8], strides = [1, 1]} : vector<8x32xf32> to vector<8x8xf32>
    %30 = vector.extract_strided_slice %10 {offsets = [0, 8], sizes = [8, 8], strides = [1, 1]} : vector<8x32xf32> to vector<8x8xf32>
    %31 = vector.extract_strided_slice %11 {offsets = [0, 8], sizes = [8, 8], strides = [1, 1]} : vector<8x32xf32> to vector<8x8xf32>
    %cst_15 = arith.constant dense<0.000000e+00> : vector<8x8xf32>
    %32 = tpu.matmul %29, %30, %cst_15 {dimension_numbers = #tpu.dot_dimension_numbers<[1], [1], [0], [0], [0, 0, 1, 0], [], []>} : vector<8x8xf32>, vector<8x8xf32>, vector<8x8xf32> -> vector<8x8xf32>
    %cst_16 = arith.constant 0.353553385 : f32
    %33 = vector.broadcast %cst_16 : f32 to vector<8x8xf32>
    %34 = arith.mulf %32, %33 : vector<8x8xf32>
    %cst_17 = arith.constant dense<0xFF800000> : vector<8xf32>
    %35 = vector.multi_reduction <maximumf>, %34, %cst_17 [1] : vector<8x8xf32> to vector<8xf32>
    %36 = vector.shape_cast %35 : vector<8xf32> to vector<8x1xf32>
    %37 = vector.broadcast %36 : vector<8x1xf32> to vector<8x8xf32>
    %38 = arith.subf %34, %37 : vector<8x8xf32>
    %39 = math.exp %38 : vector<8x8xf32>
    %cst_18 = arith.constant dense<0.000000e+00> : vector<8xf32>
    %40 = vector.multi_reduction <add>, %39, %cst_18 [1] : vector<8x8xf32> to vector<8xf32>
    %41 = vector.shape_cast %40 : vector<8xf32> to vector<8x1xf32>
    %42 = tpu.reciprocal %41 {approx = true} : vector<8x1xf32> -> vector<8x1xf32>
    %43 = vector.broadcast %42 : vector<8x1xf32> to vector<8x8xf32>
    %44 = arith.mulf %39, %43 : vector<8x8xf32>
    %cst_19 = arith.constant dense<0.000000e+00> : vector<8x8xf32>
    %45 = tpu.matmul %44, %31, %cst_19 {dimension_numbers = #tpu.dot_dimension_numbers<[1], [0], [0], [1], [0, 0, 1, 1], [], []>} : vector<8x8xf32>, vector<8x8xf32>, vector<8x8xf32> -> vector<8x8xf32>
    %46 = vector.extract_strided_slice %9 {offsets = [0, 16], sizes = [8, 8], strides = [1, 1]} : vector<8x32xf32> to vector<8x8xf32>
    %47 = vector.extract_strided_slice %10 {offsets = [0, 16], sizes = [8, 8], strides = [1, 1]} : vector<8x32xf32> to vector<8x8xf32>
    %48 = vector.extract_strided_slice %11 {offsets = [0, 16], sizes = [8, 8], strides = [1, 1]} : vector<8x32xf32> to vector<8x8xf32>
    %cst_20 = arith.constant dense<0.000000e+00> : vector<8x8xf32>
    %49 = tpu.matmul %46, %47, %cst_20 {dimension_numbers = #tpu.dot_dimension_numbers<[1], [1], [0], [0], [0, 0, 1, 0], [], []>} : vector<8x8xf32>, vector<8x8xf32>, vector<8x8xf32> -> vector<8x8xf32>
    %cst_21 = arith.constant 0.353553385 : f32
    %50 = vector.broadcast %cst_21 : f32 to vector<8x8xf32>
    %51 = arith.mulf %49, %50 : vector<8x8xf32>
    %cst_22 = arith.constant dense<0xFF800000> : vector<8xf32>
    %52 = vector.multi_reduction <maximumf>, %51, %cst_22 [1] : vector<8x8xf32> to vector<8xf32>
    %53 = vector.shape_cast %52 : vector<8xf32> to vector<8x1xf32>
    %54 = vector.broadcast %53 : vector<8x1xf32> to vector<8x8xf32>
    %55 = arith.subf %51, %54 : vector<8x8xf32>
    %56 = math.exp %55 : vector<8x8xf32>
    %cst_23 = arith.constant dense<0.000000e+00> : vector<8xf32>
    %57 = vector.multi_reduction <add>, %56, %cst_23 [1] : vector<8x8xf32> to vector<8xf32>
    %58 = vector.shape_cast %57 : vector<8xf32> to vector<8x1xf32>
    %59 = tpu.reciprocal %58 {approx = true} : vector<8x1xf32> -> vector<8x1xf32>
    %60 = vector.broadcast %59 : vector<8x1xf32> to vector<8x8xf32>
    %61 = arith.mulf %56, %60 : vector<8x8xf32>
    %cst_24 = arith.constant dense<0.000000e+00> : vector<8x8xf32>
    %62 = tpu.matmul %61, %48, %cst_24 {dimension_numbers = #tpu.dot_dimension_numbers<[1], [0], [0], [1], [0, 0, 1, 1], [], []>} : vector<8x8xf32>, vector<8x8xf32>, vector<8x8xf32> -> vector<8x8xf32>
    %63 = vector.extract_strided_slice %9 {offsets = [0, 24], sizes = [8, 8], strides = [1, 1]} : vector<8x32xf32> to vector<8x8xf32>
    %64 = vector.extract_strided_slice %10 {offsets = [0, 24], sizes = [8, 8], strides = [1, 1]} : vector<8x32xf32> to vector<8x8xf32>
    %65 = vector.extract_strided_slice %11 {offsets = [0, 24], sizes = [8, 8], strides = [1, 1]} : vector<8x32xf32> to vector<8x8xf32>
    %cst_25 = arith.constant dense<0.000000e+00> : vector<8x8xf32>
    %66 = tpu.matmul %63, %64, %cst_25 {dimension_numbers = #tpu.dot_dimension_numbers<[1], [1], [0], [0], [0, 0, 1, 0], [], []>} : vector<8x8xf32>, vector<8x8xf32>, vector<8x8xf32> -> vector<8x8xf32>
    %cst_26 = arith.constant 0.353553385 : f32
    %67 = vector.broadcast %cst_26 : f32 to vector<8x8xf32>
    %68 = arith.mulf %66, %67 : vector<8x8xf32>
    %cst_27 = arith.constant dense<0xFF800000> : vector<8xf32>
    %69 = vector.multi_reduction <maximumf>, %68, %cst_27 [1] : vector<8x8xf32> to vector<8xf32>
    %70 = vector.shape_cast %69 : vector<8xf32> to vector<8x1xf32>
    %71 = vector.broadcast %70 : vector<8x1xf32> to vector<8x8xf32>
    %72 = arith.subf %68, %71 : vector<8x8xf32>
    %73 = math.exp %72 : vector<8x8xf32>
    %cst_28 = arith.constant dense<0.000000e+00> : vector<8xf32>
    %74 = vector.multi_reduction <add>, %73, %cst_28 [1] : vector<8x8xf32> to vector<8xf32>
    %75 = vector.shape_cast %74 : vector<8xf32> to vector<8x1xf32>
    %76 = tpu.reciprocal %75 {approx = true} : vector<8x1xf32> -> vector<8x1xf32>
    %77 = vector.broadcast %76 : vector<8x1xf32> to vector<8x8xf32>
    %78 = arith.mulf %73, %77 : vector<8x8xf32>
    %cst_29 = arith.constant dense<0.000000e+00> : vector<8x8xf32>
    %79 = tpu.matmul %78, %65, %cst_29 {dimension_numbers = #tpu.dot_dimension_numbers<[1], [0], [0], [1], [0, 0, 1, 1], [], []>} : vector<8x8xf32>, vector<8x8xf32>, vector<8x8xf32> -> vector<8x8xf32>
    %80 = tpu.concatenate %28, %45, %62, %79 in 1 : vector<8x8xf32>, vector<8x8xf32>, vector<8x8xf32>, vector<8x8xf32> -> vector<8x32xf32>
    %c0_30 = arith.constant 0 : index
    %c0_31 = arith.constant 0 : index
    %81 = vector.load %arg6[%c0_30, %c0_31] : memref<32x32xf32, #tpu.memory_space<vmem>>, vector<32x32xf32>
    %cst_32 = arith.constant dense<0.000000e+00> : vector<8x32xf32>
    %82 = tpu.matmul %80, %81, %cst_32 {dimension_numbers = #tpu.dot_dimension_numbers<[1], [0], [0], [1], [0, 0, 1, 1], [], []>} : vector<8x32xf32>, vector<32x32xf32>, vector<8x32xf32> -> vector<8x32xf32>
    %c0_33 = arith.constant 0 : index
    %c0_34 = arith.constant 0 : index
    %83 = vector.load %arg7[%c0_33, %c0_34] : memref<1x32xf32, #tpu.memory_space<vmem>>, vector<1x32xf32>
    %84 = vector.broadcast %83 : vector<1x32xf32> to vector<8x32xf32>
    %85 = arith.addf %82, %84 : vector<8x32xf32>
    %86 = arith.addf %85, %0 : vector<8x32xf32>
    %c0_35 = arith.constant 0 : index
    %c0_36 = arith.constant 0 : index
    %87 = vector.load %arg8[%c0_35, %c0_36] : memref<1x32xf32, #tpu.memory_space<vmem>>, vector<1x32xf32>
    %c0_37 = arith.constant 0 : index
    %c0_38 = arith.constant 0 : index
    %88 = vector.load %arg9[%c0_37, %c0_38] : memref<1x32xf32, #tpu.memory_space<vmem>>, vector<1x32xf32>
    %cst_39 = arith.constant dense<0.000000e+00> : vector<8xf32>
    %89 = vector.multi_reduction <add>, %86, %cst_39 [1] : vector<8x32xf32> to vector<8xf32>
    %90 = vector.shape_cast %89 : vector<8xf32> to vector<8x1xf32>
    %cst_40 = arith.constant 3.200000e+01 : f32
    %91 = vector.broadcast %cst_40 : f32 to vector<8x1xf32>
    %92 = arith.divf %90, %91 : vector<8x1xf32>
    %93 = vector.broadcast %92 : vector<8x1xf32> to vector<8x32xf32>
    %94 = arith.subf %86, %93 : vector<8x32xf32>
    %95 = arith.mulf %94, %94 : vector<8x32xf32>
    %cst_41 = arith.constant dense<0.000000e+00> : vector<8xf32>
    %96 = vector.multi_reduction <add>, %95, %cst_41 [1] : vector<8x32xf32> to vector<8xf32>
    %97 = vector.shape_cast %96 : vector<8xf32> to vector<8x1xf32>
    %cst_42 = arith.constant 3.200000e+01 : f32
    %98 = vector.broadcast %cst_42 : f32 to vector<8x1xf32>
    %99 = arith.divf %97, %98 : vector<8x1xf32>
    %100 = vector.broadcast %92 : vector<8x1xf32> to vector<8x32xf32>
    %101 = arith.subf %86, %100 : vector<8x32xf32>
    %cst_43 = arith.constant 9.99999996E-13 : f32
    %102 = vector.broadcast %cst_43 : f32 to vector<8x1xf32>
    %103 = arith.addf %99, %102 : vector<8x1xf32>
    %104 = math.rsqrt %103 : vector<8x1xf32>
    %105 = vector.broadcast %104 : vector<8x1xf32> to vector<8x32xf32>
    %106 = arith.mulf %101, %105 : vector<8x32xf32>
    %107 = vector.broadcast %87 : vector<1x32xf32> to vector<8x32xf32>
    %108 = arith.mulf %106, %107 : vector<8x32xf32>
    %109 = vector.broadcast %88 : vector<1x32xf32> to vector<8x32xf32>
    %110 = arith.addf %108, %109 : vector<8x32xf32>
    %c0_44 = arith.constant 0 : index
    %c0_45 = arith.constant 0 : index
    %111 = vector.load %arg10[%c0_44, %c0_45] : memref<32x32xf32, #tpu.memory_space<vmem>>, vector<32x32xf32>
    %cst_46 = arith.constant dense<0.000000e+00> : vector<8x32xf32>
    %112 = tpu.matmul %110, %111, %cst_46 {dimension_numbers = #tpu.dot_dimension_numbers<[1], [0], [0], [1], [0, 0, 1, 1], [], []>} : vector<8x32xf32>, vector<32x32xf32>, vector<8x32xf32> -> vector<8x32xf32>
    %c0_47 = arith.constant 0 : index
    %c0_48 = arith.constant 0 : index
    %113 = vector.load %arg11[%c0_47, %c0_48] : memref<1x32xf32, #tpu.memory_space<vmem>>, vector<1x32xf32>
    %114 = vector.broadcast %113 : vector<1x32xf32> to vector<8x32xf32>
    %115 = arith.addf %112, %114 : vector<8x32xf32>
    %c0_49 = arith.constant 0 : index
    %c0_50 = arith.constant 0 : index
    %116 = vector.load %arg12[%c0_49, %c0_50] : memref<32x64xf32, #tpu.memory_space<vmem>>, vector<32x64xf32>
    %cst_51 = arith.constant dense<0.000000e+00> : vector<16x64xf32>
    %117 = tpu.matmul %1, %116, %cst_51 {dimension_numbers = #tpu.dot_dimension_numbers<[1], [0], [0], [1], [0, 0, 1, 1], [], []>} : vector<16x32xf32>, vector<32x64xf32>, vector<16x64xf32> -> vector<16x64xf32>
    %c0_52 = arith.constant 0 : index
    %c0_53 = arith.constant 0 : index
    %118 = vector.load %arg13[%c0_52, %c0_53] : memref<1x64xf32, #tpu.memory_space<vmem>>, vector<1x64xf32>
    %119 = vector.broadcast %118 : vector<1x64xf32> to vector<16x64xf32>
    %120 = arith.addf %117, %119 : vector<16x64xf32>
    %121 = vector.extract_strided_slice %120 {offsets = [0, 0], sizes = [16, 32], strides = [1, 1]} : vector<16x64xf32> to vector<16x32xf32>
    %122 = vector.extract_strided_slice %120 {offsets = [0, 32], sizes = [16, 32], strides = [1, 1]} : vector<16x64xf32> to vector<16x32xf32>
    %123 = vector.extract_strided_slice %115 {offsets = [0, 0], sizes = [8, 8], strides = [1, 1]} : vector<8x32xf32> to vector<8x8xf32>
    %124 = vector.extract_strided_slice %121 {offsets = [0, 0], sizes = [16, 8], strides = [1, 1]} : vector<16x32xf32> to vector<16x8xf32>
    %125 = vector.extract_strided_slice %122 {offsets = [0, 0], sizes = [16, 8], strides = [1, 1]} : vector<16x32xf32> to vector<16x8xf32>
    %cst_54 = arith.constant dense<0.000000e+00> : vector<8x16xf32>
    %126 = tpu.matmul %123, %124, %cst_54 {dimension_numbers = #tpu.dot_dimension_numbers<[1], [1], [0], [0], [0, 0, 1, 0], [], []>} : vector<8x8xf32>, vector<16x8xf32>, vector<8x16xf32> -> vector<8x16xf32>
    %cst_55 = arith.constant 0.353553385 : f32
    %127 = vector.broadcast %cst_55 : f32 to vector<8x16xf32>
    %128 = arith.mulf %126, %127 : vector<8x16xf32>
    %129 = arith.addf %128, %3 : vector<8x16xf32>
    %cst_56 = arith.constant dense<0xFF800000> : vector<8xf32>
    %130 = vector.multi_reduction <maximumf>, %129, %cst_56 [1] : vector<8x16xf32> to vector<8xf32>
    %131 = vector.shape_cast %130 : vector<8xf32> to vector<8x1xf32>
    %132 = vector.broadcast %131 : vector<8x1xf32> to vector<8x16xf32>
    %133 = arith.subf %129, %132 : vector<8x16xf32>
    %134 = math.exp %133 : vector<8x16xf32>
    %cst_57 = arith.constant dense<0.000000e+00> : vector<8xf32>
    %135 = vector.multi_reduction <add>, %134, %cst_57 [1] : vector<8x16xf32> to vector<8xf32>
    %136 = vector.shape_cast %135 : vector<8xf32> to vector<8x1xf32>
    %137 = tpu.reciprocal %136 {approx = true} : vector<8x1xf32> -> vector<8x1xf32>
    %138 = vector.broadcast %137 : vector<8x1xf32> to vector<8x16xf32>
    %139 = arith.mulf %134, %138 : vector<8x16xf32>
    %cst_58 = arith.constant dense<0.000000e+00> : vector<8x8xf32>
    %140 = tpu.matmul %139, %125, %cst_58 {dimension_numbers = #tpu.dot_dimension_numbers<[1], [0], [0], [1], [0, 0, 1, 1], [], []>} : vector<8x16xf32>, vector<16x8xf32>, vector<8x8xf32> -> vector<8x8xf32>
    %141 = vector.extract_strided_slice %115 {offsets = [0, 8], sizes = [8, 8], strides = [1, 1]} : vector<8x32xf32> to vector<8x8xf32>
    %142 = vector.extract_strided_slice %121 {offsets = [0, 8], sizes = [16, 8], strides = [1, 1]} : vector<16x32xf32> to vector<16x8xf32>
    %143 = vector.extract_strided_slice %122 {offsets = [0, 8], sizes = [16, 8], strides = [1, 1]} : vector<16x32xf32> to vector<16x8xf32>
    %cst_59 = arith.constant dense<0.000000e+00> : vector<8x16xf32>
    %144 = tpu.matmul %141, %142, %cst_59 {dimension_numbers = #tpu.dot_dimension_numbers<[1], [1], [0], [0], [0, 0, 1, 0], [], []>} : vector<8x8xf32>, vector<16x8xf32>, vector<8x16xf32> -> vector<8x16xf32>
    %cst_60 = arith.constant 0.353553385 : f32
    %145 = vector.broadcast %cst_60 : f32 to vector<8x16xf32>
    %146 = arith.mulf %144, %145 : vector<8x16xf32>
    %147 = arith.addf %146, %3 : vector<8x16xf32>
    %cst_61 = arith.constant dense<0xFF800000> : vector<8xf32>
    %148 = vector.multi_reduction <maximumf>, %147, %cst_61 [1] : vector<8x16xf32> to vector<8xf32>
    %149 = vector.shape_cast %148 : vector<8xf32> to vector<8x1xf32>
    %150 = vector.broadcast %149 : vector<8x1xf32> to vector<8x16xf32>
    %151 = arith.subf %147, %150 : vector<8x16xf32>
    %152 = math.exp %151 : vector<8x16xf32>
    %cst_62 = arith.constant dense<0.000000e+00> : vector<8xf32>
    %153 = vector.multi_reduction <add>, %152, %cst_62 [1] : vector<8x16xf32> to vector<8xf32>
    %154 = vector.shape_cast %153 : vector<8xf32> to vector<8x1xf32>
    %155 = tpu.reciprocal %154 {approx = true} : vector<8x1xf32> -> vector<8x1xf32>
    %156 = vector.broadcast %155 : vector<8x1xf32> to vector<8x16xf32>
    %157 = arith.mulf %152, %156 : vector<8x16xf32>
    %cst_63 = arith.constant dense<0.000000e+00> : vector<8x8xf32>
    %158 = tpu.matmul %157, %143, %cst_63 {dimension_numbers = #tpu.dot_dimension_numbers<[1], [0], [0], [1], [0, 0, 1, 1], [], []>} : vector<8x16xf32>, vector<16x8xf32>, vector<8x8xf32> -> vector<8x8xf32>
    %159 = vector.extract_strided_slice %115 {offsets = [0, 16], sizes = [8, 8], strides = [1, 1]} : vector<8x32xf32> to vector<8x8xf32>
    %160 = vector.extract_strided_slice %121 {offsets = [0, 16], sizes = [16, 8], strides = [1, 1]} : vector<16x32xf32> to vector<16x8xf32>
    %161 = vector.extract_strided_slice %122 {offsets = [0, 16], sizes = [16, 8], strides = [1, 1]} : vector<16x32xf32> to vector<16x8xf32>
    %cst_64 = arith.constant dense<0.000000e+00> : vector<8x16xf32>
    %162 = tpu.matmul %159, %160, %cst_64 {dimension_numbers = #tpu.dot_dimension_numbers<[1], [1], [0], [0], [0, 0, 1, 0], [], []>} : vector<8x8xf32>, vector<16x8xf32>, vector<8x16xf32> -> vector<8x16xf32>
    %cst_65 = arith.constant 0.353553385 : f32
    %163 = vector.broadcast %cst_65 : f32 to vector<8x16xf32>
    %164 = arith.mulf %162, %163 : vector<8x16xf32>
    %165 = arith.addf %164, %3 : vector<8x16xf32>
    %cst_66 = arith.constant dense<0xFF800000> : vector<8xf32>
    %166 = vector.multi_reduction <maximumf>, %165, %cst_66 [1] : vector<8x16xf32> to vector<8xf32>
    %167 = vector.shape_cast %166 : vector<8xf32> to vector<8x1xf32>
    %168 = vector.broadcast %167 : vector<8x1xf32> to vector<8x16xf32>
    %169 = arith.subf %165, %168 : vector<8x16xf32>
    %170 = math.exp %169 : vector<8x16xf32>
    %cst_67 = arith.constant dense<0.000000e+00> : vector<8xf32>
    %171 = vector.multi_reduction <add>, %170, %cst_67 [1] : vector<8x16xf32> to vector<8xf32>
    %172 = vector.shape_cast %171 : vector<8xf32> to vector<8x1xf32>
    %173 = tpu.reciprocal %172 {approx = true} : vector<8x1xf32> -> vector<8x1xf32>
    %174 = vector.broadcast %173 : vector<8x1xf32> to vector<8x16xf32>
    %175 = arith.mulf %170, %174 : vector<8x16xf32>
    %cst_68 = arith.constant dense<0.000000e+00> : vector<8x8xf32>
    %176 = tpu.matmul %175, %161, %cst_68 {dimension_numbers = #tpu.dot_dimension_numbers<[1], [0], [0], [1], [0, 0, 1, 1], [], []>} : vector<8x16xf32>, vector<16x8xf32>, vector<8x8xf32> -> vector<8x8xf32>
    %177 = vector.extract_strided_slice %115 {offsets = [0, 24], sizes = [8, 8], strides = [1, 1]} : vector<8x32xf32> to vector<8x8xf32>
    %178 = vector.extract_strided_slice %121 {offsets = [0, 24], sizes = [16, 8], strides = [1, 1]} : vector<16x32xf32> to vector<16x8xf32>
    %179 = vector.extract_strided_slice %122 {offsets = [0, 24], sizes = [16, 8], strides = [1, 1]} : vector<16x32xf32> to vector<16x8xf32>
    %cst_69 = arith.constant dense<0.000000e+00> : vector<8x16xf32>
    %180 = tpu.matmul %177, %178, %cst_69 {dimension_numbers = #tpu.dot_dimension_numbers<[1], [1], [0], [0], [0, 0, 1, 0], [], []>} : vector<8x8xf32>, vector<16x8xf32>, vector<8x16xf32> -> vector<8x16xf32>
    %cst_70 = arith.constant 0.353553385 : f32
    %181 = vector.broadcast %cst_70 : f32 to vector<8x16xf32>
    %182 = arith.mulf %180, %181 : vector<8x16xf32>
    %183 = arith.addf %182, %3 : vector<8x16xf32>
    %cst_71 = arith.constant dense<0xFF800000> : vector<8xf32>
    %184 = vector.multi_reduction <maximumf>, %183, %cst_71 [1] : vector<8x16xf32> to vector<8xf32>
    %185 = vector.shape_cast %184 : vector<8xf32> to vector<8x1xf32>
    %186 = vector.broadcast %185 : vector<8x1xf32> to vector<8x16xf32>
    %187 = arith.subf %183, %186 : vector<8x16xf32>
    %188 = math.exp %187 : vector<8x16xf32>
    %cst_72 = arith.constant dense<0.000000e+00> : vector<8xf32>
    %189 = vector.multi_reduction <add>, %188, %cst_72 [1] : vector<8x16xf32> to vector<8xf32>
    %190 = vector.shape_cast %189 : vector<8xf32> to vector<8x1xf32>
    %191 = tpu.reciprocal %190 {approx = true} : vector<8x1xf32> -> vector<8x1xf32>
    %192 = vector.broadcast %191 : vector<8x1xf32> to vector<8x16xf32>
    %193 = arith.mulf %188, %192 : vector<8x16xf32>
    %cst_73 = arith.constant dense<0.000000e+00> : vector<8x8xf32>
    %194 = tpu.matmul %193, %179, %cst_73 {dimension_numbers = #tpu.dot_dimension_numbers<[1], [0], [0], [1], [0, 0, 1, 1], [], []>} : vector<8x16xf32>, vector<16x8xf32>, vector<8x8xf32> -> vector<8x8xf32>
    %195 = tpu.concatenate %140, %158, %176, %194 in 1 : vector<8x8xf32>, vector<8x8xf32>, vector<8x8xf32>, vector<8x8xf32> -> vector<8x32xf32>
    %c0_74 = arith.constant 0 : index
    %c0_75 = arith.constant 0 : index
    %196 = vector.load %arg14[%c0_74, %c0_75] : memref<32x32xf32, #tpu.memory_space<vmem>>, vector<32x32xf32>
    %cst_76 = arith.constant dense<0.000000e+00> : vector<8x32xf32>
    %197 = tpu.matmul %195, %196, %cst_76 {dimension_numbers = #tpu.dot_dimension_numbers<[1], [0], [0], [1], [0, 0, 1, 1], [], []>} : vector<8x32xf32>, vector<32x32xf32>, vector<8x32xf32> -> vector<8x32xf32>
    %c0_77 = arith.constant 0 : index
    %c0_78 = arith.constant 0 : index
    %198 = vector.load %arg15[%c0_77, %c0_78] : memref<1x32xf32, #tpu.memory_space<vmem>>, vector<1x32xf32>
    %199 = vector.broadcast %198 : vector<1x32xf32> to vector<8x32xf32>
    %200 = arith.addf %197, %199 : vector<8x32xf32>
    %201 = arith.addf %200, %110 : vector<8x32xf32>
    %c0_79 = arith.constant 0 : index
    %c0_80 = arith.constant 0 : index
    %202 = vector.load %arg16[%c0_79, %c0_80] : memref<1x32xf32, #tpu.memory_space<vmem>>, vector<1x32xf32>
    %c0_81 = arith.constant 0 : index
    %c0_82 = arith.constant 0 : index
    %203 = vector.load %arg17[%c0_81, %c0_82] : memref<1x32xf32, #tpu.memory_space<vmem>>, vector<1x32xf32>
    %cst_83 = arith.constant dense<0.000000e+00> : vector<8xf32>
    %204 = vector.multi_reduction <add>, %201, %cst_83 [1] : vector<8x32xf32> to vector<8xf32>
    %205 = vector.shape_cast %204 : vector<8xf32> to vector<8x1xf32>
    %cst_84 = arith.constant 3.200000e+01 : f32
    %206 = vector.broadcast %cst_84 : f32 to vector<8x1xf32>
    %207 = arith.divf %205, %206 : vector<8x1xf32>
    %208 = vector.broadcast %207 : vector<8x1xf32> to vector<8x32xf32>
    %209 = arith.subf %201, %208 : vector<8x32xf32>
    %210 = arith.mulf %209, %209 : vector<8x32xf32>
    %cst_85 = arith.constant dense<0.000000e+00> : vector<8xf32>
    %211 = vector.multi_reduction <add>, %210, %cst_85 [1] : vector<8x32xf32> to vector<8xf32>
    %212 = vector.shape_cast %211 : vector<8xf32> to vector<8x1xf32>
    %cst_86 = arith.constant 3.200000e+01 : f32
    %213 = vector.broadcast %cst_86 : f32 to vector<8x1xf32>
    %214 = arith.divf %212, %213 : vector<8x1xf32>
    %215 = vector.broadcast %207 : vector<8x1xf32> to vector<8x32xf32>
    %216 = arith.subf %201, %215 : vector<8x32xf32>
    %cst_87 = arith.constant 9.99999996E-13 : f32
    %217 = vector.broadcast %cst_87 : f32 to vector<8x1xf32>
    %218 = arith.addf %214, %217 : vector<8x1xf32>
    %219 = math.rsqrt %218 : vector<8x1xf32>
    %220 = vector.broadcast %219 : vector<8x1xf32> to vector<8x32xf32>
    %221 = arith.mulf %216, %220 : vector<8x32xf32>
    %222 = vector.broadcast %202 : vector<1x32xf32> to vector<8x32xf32>
    %223 = arith.mulf %221, %222 : vector<8x32xf32>
    %224 = vector.broadcast %203 : vector<1x32xf32> to vector<8x32xf32>
    %225 = arith.addf %223, %224 : vector<8x32xf32>
    %c0_88 = arith.constant 0 : index
    %c0_89 = arith.constant 0 : index
    %226 = vector.load %arg18[%c0_88, %c0_89] : memref<32x64xf32, #tpu.memory_space<vmem>>, vector<32x64xf32>
    %cst_90 = arith.constant dense<0.000000e+00> : vector<8x64xf32>
    %227 = tpu.matmul %225, %226, %cst_90 {dimension_numbers = #tpu.dot_dimension_numbers<[1], [0], [0], [1], [0, 0, 1, 1], [], []>} : vector<8x32xf32>, vector<32x64xf32>, vector<8x64xf32> -> vector<8x64xf32>
    %c0_91 = arith.constant 0 : index
    %c0_92 = arith.constant 0 : index
    %228 = vector.load %arg19[%c0_91, %c0_92] : memref<1x64xf32, #tpu.memory_space<vmem>>, vector<1x64xf32>
    %229 = vector.broadcast %228 : vector<1x64xf32> to vector<8x64xf32>
    %230 = arith.addf %227, %229 : vector<8x64xf32>
    %cst_93 = arith.constant 0.707106769 : f32
    %231 = vector.broadcast %cst_93 : f32 to vector<8x64xf32>
    %232 = arith.mulf %230, %231 : vector<8x64xf32>
    %cst_94 = arith.constant 0.000000e+00 : f32
    %233 = vector.broadcast %cst_94 : f32 to vector<8x64xf32>
    %234 = arith.cmpf oge, %232, %233 : vector<8x64xf32>
    %cst_95 = arith.constant 1.000000e+00 : f32
    %cst_96 = arith.constant -1.000000e+00 : f32
    %235 = vector.broadcast %cst_95 : f32 to vector<8x64xf32>
    %236 = vector.broadcast %cst_96 : f32 to vector<8x64xf32>
    %237 = arith.select %234, %235, %236 : vector<8x64xi1>, vector<8x64xf32>
    %238 = math.absf %232 : vector<8x64xf32>
    %cst_97 = arith.constant 0.327591091 : f32
    %239 = vector.broadcast %cst_97 : f32 to vector<8x64xf32>
    %240 = arith.mulf %239, %238 : vector<8x64xf32>
    %cst_98 = arith.constant 1.000000e+00 : f32
    %241 = vector.broadcast %cst_98 : f32 to vector<8x64xf32>
    %242 = arith.addf %241, %240 : vector<8x64xf32>
    %cst_99 = arith.constant 1.000000e+00 : f32
    %243 = vector.broadcast %cst_99 : f32 to vector<8x64xf32>
    %244 = arith.divf %243, %242 : vector<8x64xf32>
    %cst_100 = arith.constant 1.06140542 : f32
    %245 = vector.broadcast %cst_100 : f32 to vector<8x64xf32>
    %246 = arith.mulf %244, %245 : vector<8x64xf32>
    %cst_101 = arith.constant -1.45315206 : f32
    %247 = vector.broadcast %cst_101 : f32 to vector<8x64xf32>
    %248 = arith.addf %247, %246 : vector<8x64xf32>
    %249 = arith.mulf %244, %248 : vector<8x64xf32>
    %cst_102 = arith.constant 1.42141378 : f32
    %250 = vector.broadcast %cst_102 : f32 to vector<8x64xf32>
    %251 = arith.addf %250, %249 : vector<8x64xf32>
    %252 = arith.mulf %244, %251 : vector<8x64xf32>
    %cst_103 = arith.constant -0.284496725 : f32
    %253 = vector.broadcast %cst_103 : f32 to vector<8x64xf32>
    %254 = arith.addf %253, %252 : vector<8x64xf32>
    %255 = arith.mulf %244, %254 : vector<8x64xf32>
    %cst_104 = arith.constant 0.254829586 : f32
    %256 = vector.broadcast %cst_104 : f32 to vector<8x64xf32>
    %257 = arith.addf %256, %255 : vector<8x64xf32>
    %258 = arith.mulf %244, %257 : vector<8x64xf32>
    %cst_105 = arith.constant 0.000000e+00 : f32
    %259 = vector.broadcast %cst_105 : f32 to vector<8x64xf32>
    %260 = arith.subf %259, %238 : vector<8x64xf32>
    %261 = arith.mulf %260, %238 : vector<8x64xf32>
    %262 = math.exp %261 : vector<8x64xf32>
    %263 = arith.mulf %258, %262 : vector<8x64xf32>
    %cst_106 = arith.constant 1.000000e+00 : f32
    %264 = vector.broadcast %cst_106 : f32 to vector<8x64xf32>
    %265 = arith.subf %264, %263 : vector<8x64xf32>
    %266 = arith.mulf %237, %265 : vector<8x64xf32>
    %cst_107 = arith.constant 5.000000e-01 : f32
    %267 = vector.broadcast %cst_107 : f32 to vector<8x64xf32>
    %268 = arith.mulf %267, %230 : vector<8x64xf32>
    %cst_108 = arith.constant 1.000000e+00 : f32
    %269 = vector.broadcast %cst_108 : f32 to vector<8x64xf32>
    %270 = arith.addf %269, %266 : vector<8x64xf32>
    %271 = arith.mulf %268, %270 : vector<8x64xf32>
    %c0_109 = arith.constant 0 : index
    %c0_110 = arith.constant 0 : index
    %272 = vector.load %arg20[%c0_109, %c0_110] : memref<64x32xf32, #tpu.memory_space<vmem>>, vector<64x32xf32>
    %cst_111 = arith.constant dense<0.000000e+00> : vector<8x32xf32>
    %273 = tpu.matmul %271, %272, %cst_111 {dimension_numbers = #tpu.dot_dimension_numbers<[1], [0], [0], [1], [0, 0, 1, 1], [], []>} : vector<8x64xf32>, vector<64x32xf32>, vector<8x32xf32> -> vector<8x32xf32>
    %c0_112 = arith.constant 0 : index
    %c0_113 = arith.constant 0 : index
    %274 = vector.load %arg21[%c0_112, %c0_113] : memref<1x32xf32, #tpu.memory_space<vmem>>, vector<1x32xf32>
    %275 = vector.broadcast %274 : vector<1x32xf32> to vector<8x32xf32>
    %276 = arith.addf %273, %275 : vector<8x32xf32>
    %277 = arith.addf %276, %225 : vector<8x32xf32>
    %c0_114 = arith.constant 0 : index
    %c0_115 = arith.constant 0 : index
    %278 = vector.load %arg22[%c0_114, %c0_115] : memref<1x32xf32, #tpu.memory_space<vmem>>, vector<1x32xf32>
    %c0_116 = arith.constant 0 : index
    %c0_117 = arith.constant 0 : index
    %279 = vector.load %arg23[%c0_116, %c0_117] : memref<1x32xf32, #tpu.memory_space<vmem>>, vector<1x32xf32>
    %cst_118 = arith.constant dense<0.000000e+00> : vector<8xf32>
    %280 = vector.multi_reduction <add>, %277, %cst_118 [1] : vector<8x32xf32> to vector<8xf32>
    %281 = vector.shape_cast %280 : vector<8xf32> to vector<8x1xf32>
    %cst_119 = arith.constant 3.200000e+01 : f32
    %282 = vector.broadcast %cst_119 : f32 to vector<8x1xf32>
    %283 = arith.divf %281, %282 : vector<8x1xf32>
    %284 = vector.broadcast %283 : vector<8x1xf32> to vector<8x32xf32>
    %285 = arith.subf %277, %284 : vector<8x32xf32>
    %286 = arith.mulf %285, %285 : vector<8x32xf32>
    %cst_120 = arith.constant dense<0.000000e+00> : vector<8xf32>
    %287 = vector.multi_reduction <add>, %286, %cst_120 [1] : vector<8x32xf32> to vector<8xf32>
    %288 = vector.shape_cast %287 : vector<8xf32> to vector<8x1xf32>
    %cst_121 = arith.constant 3.200000e+01 : f32
    %289 = vector.broadcast %cst_121 : f32 to vector<8x1xf32>
    %290 = arith.divf %288, %289 : vector<8x1xf32>
    %291 = vector.broadcast %283 : vector<8x1xf32> to vector<8x32xf32>
    %292 = arith.subf %277, %291 : vector<8x32xf32>
    %cst_122 = arith.constant 9.99999996E-13 : f32
    %293 = vector.broadcast %cst_122 : f32 to vector<8x1xf32>
    %294 = arith.addf %290, %293 : vector<8x1xf32>
    %295 = math.rsqrt %294 : vector<8x1xf32>
    %296 = vector.broadcast %295 : vector<8x1xf32> to vector<8x32xf32>
    %297 = arith.mulf %292, %296 : vector<8x32xf32>
    %298 = vector.broadcast %278 : vector<1x32xf32> to vector<8x32xf32>
    %299 = arith.mulf %297, %298 : vector<8x32xf32>
    %300 = vector.broadcast %279 : vector<1x32xf32> to vector<8x32xf32>
    %301 = arith.addf %299, %300 : vector<8x32xf32>
    %c0_123 = arith.constant 0 : index
    %c0_124 = arith.constant 0 : index
    %302 = vector.load %arg24[%c0_123, %c0_124] : memref<8x32xf32, #tpu.memory_space<vmem>>, vector<8x32xf32>
    tpu.vector_store %arg24[%c0_123, %c0_124], %301 {strides = array<i32>} : memref<8x32xf32, #tpu.memory_space<vmem>>, vector<8x32xf32>,
    return
  }
  func.func @transform_0(%arg0: i32) -> (i32, i32) {
    %c0_i32 = arith.constant 0 : i32
    %c0_i32_0 = arith.constant 0 : i32
    return %arg0, %c0_i32 : i32, i32
  }
  func.func @transform_1(%arg0: i32) -> (i32, i32) {
    %c0_i32 = arith.constant 0 : i32
    %c0_i32_0 = arith.constant 0 : i32
    return %arg0, %c0_i32 : i32, i32
  }
  func.func @transform_2(%arg0: i32) -> (i32, i32, i32) {
    %c0_i32 = arith.constant 0 : i32
    %c0_i32_0 = arith.constant 0 : i32
    %c0_i32_1 = arith.constant 0 : i32
    return %arg0, %c0_i32, %c0_i32_0 : i32, i32, i32
  }
  func.func @transform_3(%arg0: i32) -> (i32, i32) {
    %c0_i32 = arith.constant 0 : i32
    %c0_i32_0 = arith.constant 0 : i32
    %c0_i32_1 = arith.constant 0 : i32
    return %c0_i32, %c0_i32_0 : i32, i32
  }
  func.func @transform_4(%arg0: i32) -> (i32, i32) {
    %c0_i32 = arith.constant 0 : i32
    %c0_i32_0 = arith.constant 0 : i32
    %c0_i32_1 = arith.constant 0 : i32
    return %c0_i32, %c0_i32_0 : i32, i32
  }
  func.func @transform_5(%arg0: i32) -> (i32, i32) {
    %c0_i32 = arith.constant 0 : i32
    %c0_i32_0 = arith.constant 0 : i32
    %c0_i32_1 = arith.constant 0 : i32
    return %c0_i32, %c0_i32_0 : i32, i32
  }
  func.func @transform_6(%arg0: i32) -> (i32, i32) {
    %c0_i32 = arith.constant 0 : i32
    %c0_i32_0 = arith.constant 0 : i32
    %c0_i32_1 = arith.constant 0 : i32
    return %c0_i32, %c0_i32_0 : i32, i32
  }
  func.func @transform_7(%arg0: i32) -> (i32, i32) {
    %c0_i32 = arith.constant 0 : i32
    %c0_i32_0 = arith.constant 0 : i32
    %c0_i32_1 = arith.constant 0 : i32
    return %c0_i32, %c0_i32_0 : i32, i32
  }
  func.func @transform_8(%arg0: i32) -> (i32, i32) {
    %c0_i32 = arith.constant 0 : i32
    %c0_i32_0 = arith.constant 0 : i32
    %c0_i32_1 = arith.constant 0 : i32
    return %c0_i32, %c0_i32_0 : i32, i32
  }
  func.func @transform_9(%arg0: i32) -> (i32, i32) {
    %c0_i32 = arith.constant 0 : i32
    %c0_i32_0 = arith.constant 0 : i32
    %c0_i32_1 = arith.constant 0 : i32
    return %c0_i32, %c0_i32_0 : i32, i32
  }
  func.func @transform_10(%arg0: i32) -> (i32, i32) {
    %c0_i32 = arith.constant 0 : i32
    %c0_i32_0 = arith.constant 0 : i32
    %c0_i32_1 = arith.constant 0 : i32
    return %c0_i32, %c0_i32_0 : i32, i32
  }
  func.func @transform_11(%arg0: i32) -> (i32, i32) {
    %c0_i32 = arith.constant 0 : i32
    %c0_i32_0 = arith.constant 0 : i32
    %c0_i32_1 = arith.constant 0 : i32
    return %c0_i32, %c0_i32_0 : i32, i32
  }
  func.func @transform_12(%arg0: i32) -> (i32, i32) {
    %c0_i32 = arith.constant 0 : i32
    %c0_i32_0 = arith.constant 0 : i32
    %c0_i32_1 = arith.constant 0 : i32
    return %c0_i32, %c0_i32_0 : i32, i32
  }
  func.func @transform_13(%arg0: i32) -> (i32, i32) {
    %c0_i32 = arith.constant 0 : i32
    %c0_i32_0 = arith.constant 0 : i32
    %c0_i32_1 = arith.constant 0 : i32
    return %c0_i32, %c0_i32_0 : i32, i32
  }
  func.func @transform_14(%arg0: i32) -> (i32, i32) {
    %c0_i32 = arith.constant 0 : i32
    %c0_i32_0 = arith.constant 0 : i32
    %c0_i32_1 = arith.constant 0 : i32
    return %c0_i32, %c0_i32_0 : i32, i32
  }
  func.func @transform_15(%arg0: i32) -> (i32, i32) {
    %c0_i32 = arith.constant 0 : i32
    %c0_i32_0 = arith.constant 0 : i32
    %c0_i32_1 = arith.constant 0 : i32
    return %c0_i32, %c0_i32_0 : i32, i32
  }
  func.func @transform_16(%arg0: i32) -> (i32, i32) {
    %c0_i32 = arith.constant 0 : i32
    %c0_i32_0 = arith.constant 0 : i32
    %c0_i32_1 = arith.constant 0 : i32
    return %c0_i32, %c0_i32_0 : i32, i32
  }
  func.func @transform_17(%arg0: i32) -> (i32, i32) {
    %c0_i32 = arith.constant 0 : i32
    %c0_i32_0 = arith.constant 0 : i32
    %c0_i32_1 = arith.constant 0 : i32
    return %c0_i32, %c0_i32_0 : i32, i32
  }
  func.func @transform_18(%arg0: i32) -> (i32, i32) {
    %c0_i32 = arith.constant 0 : i32
    %c0_i32_0 = arith.constant 0 : i32
    %c0_i32_1 = arith.constant 0 : i32
    return %c0_i32, %c0_i32_0 : i32, i32
  }
  func.func @transform_19(%arg0: i32) -> (i32, i32) {
    %c0_i32 = arith.constant 0 : i32
    %c0_i32_0 = arith.constant 0 : i32
    %c0_i32_1 = arith.constant 0 : i32
    return %c0_i32, %c0_i32_0 : i32, i32
  }
  func.func @transform_20(%arg0: i32) -> (i32, i32) {
    %c0_i32 = arith.constant 0 : i32
    %c0_i32_0 = arith.constant 0 : i32
    %c0_i32_1 = arith.constant 0 : i32
    return %c0_i32, %c0_i32_0 : i32, i32
  }
  func.func @transform_21(%arg0: i32) -> (i32, i32) {
    %c0_i32 = arith.constant 0 : i32
    %c0_i32_0 = arith.constant 0 : i32
    %c0_i32_1 = arith.constant 0 : i32
    return %c0_i32, %c0_i32_0 : i32, i32
  }
  func.func @transform_22(%arg0: i32) -> (i32, i32) {
    %c0_i32 = arith.constant 0 : i32
    %c0_i32_0 = arith.constant 0 : i32
    %c0_i32_1 = arith.constant 0 : i32
    return %c0_i32, %c0_i32_0 : i32, i32
  }
  func.func @transform_23(%arg0: i32) -> (i32, i32) {
    %c0_i32 = arith.constant 0 : i32
    %c0_i32_0 = arith.constant 0 : i32
    return %arg0, %c0_i32 : i32, i32
  }
}

</mosaic_0001>

<llo_original>
// kernel: decoder_layer.1
$region0: #{decoder_layer.1}
  #allocation0 [shape = 'u32[]', space=smem, size = 0x4, offset = 0x4, fixed_abs, tag = 'smem constant byte address 0x4 - core index']
  #allocation1 [shape = 'u32[72,128]{1,0:T(1,128)}', space=vmem, size = 0x9000, scoped, tag = 'internal scratch']
  %s0 = inlined_call_operand.hbm [shape: f32[16,32], index: 0, kind: input, shape index: {}]
  %s1 = inlined_call_operand.vmem [shape: f32[32,32], index: 1, kind: input, shape index: {}]
  %s2 = inlined_call_operand.vmem [shape: f32[2,8,16], index: 2, kind: input, shape index: {}]
  %s3 = inlined_call_operand.vmem [shape: f32[32,96], index: 3, kind: input, shape index: {}]
  %s4 = inlined_call_operand.vmem [shape: f32[1,96], index: 4, kind: input, shape index: {}]
  %s5 = inlined_call_operand.vmem [shape: f32[32,32], index: 5, kind: input, shape index: {}]
  %s6 = inlined_call_operand.vmem [shape: f32[1,32], index: 6, kind: input, shape index: {}]
  %s7 = inlined_call_operand.vmem [shape: f32[1,32], index: 7, kind: input, shape index: {}]
  %s8 = inlined_call_operand.vmem [shape: f32[1,32], index: 8, kind: input, shape index: {}]
  %s9 = inlined_call_operand.hbm [shape: f32[32,32], index: 9, kind: input, shape index: {}]
  %s10 = inlined_call_operand.vmem [shape: f32[1,32], index: 10, kind: input, shape index: {}]
  %s11 = inlined_call_operand.hbm [shape: f32[32,64], index: 11, kind: input, shape index: {}]
  %s12 = inlined_call_operand.vmem [shape: f32[1,64], index: 12, kind: input, shape index: {}]
  %s13 = inlined_call_operand.hbm [shape: f32[32,32], index: 13, kind: input, shape index: {}]
  %s14 = inlined_call_operand.vmem [shape: f32[1,32], index: 14, kind: input, shape index: {}]
  %s15 = inlined_call_operand.hbm [shape: f32[1,32], index: 15, kind: input, shape index: {}]
  %s16 = inlined_call_operand.hbm [shape: f32[1,32], index: 16, kind: input, shape index: {}]
  %s17 = inlined_call_operand.hbm [shape: f32[32,64], index: 17, kind: input, shape index: {}]
  %s18 = inlined_call_operand.hbm [shape: f32[1,64], index: 18, kind: input, shape index: {}]
  %s19 = inlined_call_operand.vmem [shape: f32[64,32], index: 19, kind: input, shape index: {}]
  %s20 = inlined_call_operand.hbm [shape: f32[1,32], index: 20, kind: input, shape index: {}]
  %s21 = inlined_call_operand.hbm [shape: f32[1,32], index: 21, kind: input, shape index: {}]
  %s22 = inlined_call_operand.hbm [shape: f32[1,32], index: 22, kind: input, shape index: {}]
  %s23 = inlined_call_operand.hbm [shape: f32[16,32], index: 23, kind: output, shape index: {}]
  %s24 = sld [smem:[#allocation0]]
  $region169: #{decoder_layer.1} parent=0
    _
  %s26 = ssub.s32 1, %s24
  %s27 = scalar_select 0, %s26, %s24
  $region1: #{decoder_layer.1} parent=0
    #allocation2 [shape = 'u8[8192]{0}', space=vmem, size = 0x2000, scoped, tag = 'input window, operand 0']
    #allocation3 [shape = 's32[2]{0}', space=sflag, size = 0x8, scoped, tag = 'scoped memory for decoder_layer.1']
    #allocation4 [shape = 's32[2]{0}', space=sflag, size = 0x8, scoped, tag = 'scoped memory for decoder_layer.1']
    #allocation5 [shape = 'u8[16384]{0}', space=vmem, size = 0x4000, scoped, tag = 'input window, operand 9, single buffered']
    #allocation6 [shape = 's32[1]{0}', space=sflag, size = 0x4, scoped, tag = 'scoped memory for decoder_layer.1']
    #allocation7 [shape = 'u8[16384]{0}', space=vmem, size = 0x4000, scoped, tag = 'input window, operand 11, single buffered']
    #allocation8 [shape = 'u8[16384]{0}', space=vmem, size = 0x4000, scoped, tag = 'input window, operand 13, single buffered']
    #allocation9 [shape = 's32[1]{0}', space=sflag, size = 0x4, scoped, tag = 'scoped memory for decoder_layer.1']
    #allocation10 [shape = 'u8[512]{0}', space=vmem, size = 0x400, scoped, tag = 'input window, operand 15, single buffered']
    #allocation11 [shape = 'u8[512]{0}', space=vmem, size = 0x400, scoped, tag = 'input window, operand 16, single buffered']
    #allocation12 [shape = 's32[1]{0}', space=sflag, size = 0x4, scoped, tag = 'scoped memory for decoder_layer.1']
    #allocation13 [shape = 'u8[16384]{0}', space=vmem, size = 0x4000, scoped, tag = 'input window, operand 17, single buffered']
    #allocation14 [shape = 'u8[512]{0}', space=vmem, size = 0x400, scoped, tag = 'input window, operand 18, single buffered']
    #allocation15 [shape = 's32[1]{0}', space=sflag, size = 0x4, scoped, tag = 'scoped memory for decoder_layer.1']
    #allocation16 [shape = 'u8[512]{0}', space=vmem, size = 0x400, scoped, tag = 'input window, operand 20, single buffered']
    #allocation17 [shape = 'u8[512]{0}', space=vmem, size = 0x400, scoped, tag = 'input window, operand 21, single buffered']
    #allocation18 [shape = 's32[1]{0}', space=sflag, size = 0x4, scoped, tag = 'scoped memory for decoder_layer.1']
    #allocation19 [shape = 'u8[512]{0}', space=vmem, size = 0x400, scoped, tag = 'input window, operand 22, single buffered']
    #allocation20 [shape = 'u8[8192]{0}', space=vmem, size = 0x2000, scoped, tag = 'output window, operand 0']
    %28 = vsyncpa [#allocation3], 0
    %s29 = scalar_lea.sflag [#allocation3], 1
    %30 = vsyncpa %s29, 0
    %31 = vsyncpa [#allocation6], 0
    %32 = vsyncpa [#allocation9], 0
    %33 = vsyncpa [#allocation12], 0
    %34 = vsyncpa [#allocation15], 0
    %35 = vsyncpa [#allocation18], 0
    %36 = vsyncpa [#allocation4], 0
    %s37 = scalar_lea.sflag [#allocation4], 1
    %38 = vsyncpa %s37, 0
    loop: start=0, step=1, limit=4
    $region2: #{decoder_layer.1} parent=1 // loop_pre_header
      _
    $region3: #{decoder_layer.1} parent=1 // loop_header
      %s40 = sphi 0, %s44
      %p41 = scmp.ge.s32.totalorder %s40, 4
      %s50 = sphi 0, %s52
      %s53 = sphi 0, %s50
      %s54 = sphi 0, %s53
      %s70 = sphi 0, %s54
      %s76 = sphi 0, %s78
      %s79 = sphi 0, %s76
      %s80 = sphi 0, %s79
      %s96 = sphi 0, %s80
      %s102 = sphi 0, %s104
      %s105 = sphi 0, %s102
      %s106 = sphi 0, %s105
      %s122 = sphi 0, %s106
      %s126 = sphi 0, %s126
      %s128 = sphi 0, %s126
      %s129 = sphi 0, %s128
      %s143 = sphi 0, %s129
      %s147 = sphi 0, %s147
      %s149 = sphi 0, %s147
      %s150 = sphi 0, %s149
      %s164 = sphi 0, %s150
      %s168 = sphi 0, %s168
      %s170 = sphi 0, %s168
      %s171 = sphi 0, %s170
      %s185 = sphi 0, %s171
      %s189 = sphi 0, %s189
      %s191 = sphi 0, %s189
      %s192 = sphi 0, %s191
      %s206 = sphi 0, %s192
      %s210 = sphi 0, %s210
      %s212 = sphi 0, %s210
      %s213 = sphi 0, %s212
      %s227 = sphi 0, %s213
      %s231 = sphi 0, %s231
      %s233 = sphi 0, %s231
      %s234 = sphi 0, %s233
      %s248 = sphi 0, %s234
      %s252 = sphi 0, %s252
      %s254 = sphi 0, %s252
      %s255 = sphi 0, %s254
      %s269 = sphi 0, %s255
      %s273 = sphi 0, %s273
      %s275 = sphi 0, %s273
      %s276 = sphi 0, %s275
      %s290 = sphi 0, %s276
      %s294 = sphi 0, %s294
      %s296 = sphi 0, %s294
      %s297 = sphi 0, %s296
      %s311 = sphi 0, %s297
      %s315 = sphi 0, %s315
      %s317 = sphi 0, %s315
      %s318 = sphi 0, %s317
      %s332 = sphi 0, %s318
      %s336 = sphi 0, %s336
      %s338 = sphi 0, %s336
      %s339 = sphi 0, %s338
      %s353 = sphi 0, %s339
      %s357 = sphi 0, %s357
      %s359 = sphi 0, %s357
      %s360 = sphi 0, %s359
      %s374 = sphi 0, %s360
      %s378 = sphi 0, %s378
      %s380 = sphi 0, %s378
      %s381 = sphi 0, %s380
      %s395 = sphi 0, %s381
      %s399 = sphi 0, %s399
      %s401 = sphi 0, %s399
      %s402 = sphi 0, %s401
      %s416 = sphi 0, %s402
      %s420 = sphi 0, %s420
      %s422 = sphi 0, %s420
      %s423 = sphi 0, %s422
      %s437 = sphi 0, %s423
      %s441 = sphi 0, %s441
      %s443 = sphi 0, %s441
      %s444 = sphi 0, %s443
      %s458 = sphi 0, %s444
      %s462 = sphi 0, %s462
      %s464 = sphi 0, %s462
      %s465 = sphi 0, %s464
      %s479 = sphi 0, %s465
      %s483 = sphi 0, %s483
      %s485 = sphi 0, %s483
      %s486 = sphi 0, %s485
      %s500 = sphi 0, %s486
      %s504 = sphi 0, %s504
      %s506 = sphi 0, %s504
      %s507 = sphi 0, %s506
      %s521 = sphi 0, %s507
      %s525 = sphi 0, %s525
      %s527 = sphi 0, %s525
      %s528 = sphi 0, %s527
      %s542 = sphi 0, %s528
      %s548 = sphi 0, %s550
      %s551 = sphi 0, %s548
      %s552 = sphi 0, %s551
      %s568 = sphi 0, %s552
    $region4: #{decoder_layer.1} parent=1 // loop_header_branch
      %43 = sbr.rel (%p41) target = $region8
    $region5: #{decoder_layer.1} parent=1 // loop_body
      %s45 = ssub.s32 %s40, 1
      %s46 = ssub.s32 %s40, 2
      %s47 = sadd.s32 %s40, 1
      %s48 = ssub.s32 %s40, %s47
      %p49 = scmp.eq.s32.totalorder %s48, 0
      %s51 = sadd.s32 %s50, 1
      %s52 = scalar_select %p49, %s50, %s51
      %p55 = pneg %p49
      %p56 = scmp.eq.s32.totalorder %s40, 1
      %p57 = por %p55, %p56
      %p58 = scmp.ne.s32.totalorder %s50, %s53
      %p59 = scmp.eq.s32.totalorder %s40, 0
      %p60 = por %p58, %p59
      %p61 = scmp.ne.s32.totalorder %s50, %s53
      %p62 = scmp.eq.s32.totalorder %s45, 1
      %p63 = por %p61, %p62
      %p64 = scmp.ne.s32.totalorder %s53, %s54
      %p65 = scmp.eq.s32.totalorder %s45, 0
      %p66 = por %p64, %p65
      %p67 = scmp.ne.s32.totalorder %s53, %s54
      %p68 = scmp.eq.s32.totalorder %s46, 1
      %p69 = por %p67, %p68
      %p71 = scmp.ne.s32.totalorder %s54, %s70
      %p72 = scmp.eq.s32.totalorder %s46, 0
      %p73 = por %p71, %p72
      %s74 = ssub.s32 %s40, %s47
      %p75 = scmp.eq.s32.totalorder %s74, 0
      %s77 = sadd.s32 %s76, 1
      %s78 = scalar_select %p75, %s76, %s77
      %p81 = pneg %p75
      %p82 = scmp.eq.s32.totalorder %s40, 1
      %p83 = por %p81, %p82
      %p84 = scmp.ne.s32.totalorder %s76, %s79
      %p85 = scmp.eq.s32.totalorder %s40, 0
      %p86 = por %p84, %p85
      %p87 = scmp.ne.s32.totalorder %s76, %s79
      %p88 = scmp.eq.s32.totalorder %s45, 1
      %p89 = por %p87, %p88
      %p90 = scmp.ne.s32.totalorder %s79, %s80
      %p91 = scmp.eq.s32.totalorder %s45, 0
      %p92 = por %p90, %p91
      %p93 = scmp.ne.s32.totalorder %s79, %s80
      %p94 = scmp.eq.s32.totalorder %s46, 1
      %p95 = por %p93, %p94
      %p97 = scmp.ne.s32.totalorder %s80, %s96
      %p98 = scmp.eq.s32.totalorder %s46, 0
      %p99 = por %p97, %p98
      %s100 = ssub.s32 %s40, %s47
      %p101 = scmp.eq.s32.totalorder %s100, 0
      %s103 = sadd.s32 %s102, 1
      %s104 = scalar_select %p101, %s102, %s103
      %p107 = pneg %p101
      %p108 = scmp.eq.s32.totalorder %s40, 1
      %p109 = por %p107, %p108
      %p110 = scmp.ne.s32.totalorder %s102, %s105
      %p111 = scmp.eq.s32.totalorder %s40, 0
      %p112 = por %p110, %p111
      %p113 = scmp.ne.s32.totalorder %s102, %s105
      %p114 = scmp.eq.s32.totalorder %s45, 1
      %p115 = por %p113, %p114
      %p116 = scmp.ne.s32.totalorder %s105, %s106
      %p117 = scmp.eq.s32.totalorder %s45, 0
      %p118 = por %p116, %p117
      %p119 = scmp.ne.s32.totalorder %s105, %s106
      %p120 = scmp.eq.s32.totalorder %s46, 1
      %p121 = por %p119, %p120
      %p123 = scmp.ne.s32.totalorder %s106, %s122
      %p124 = scmp.eq.s32.totalorder %s46, 0
      %p125 = por %p123, %p124
      %s127 = sadd.s32 %s126, 1
      %p130 = scmp.eq.s32.totalorder %s40, 1
      %p131 = scmp.ne.s32.totalorder %s126, %s128
      %p132 = scmp.eq.s32.totalorder %s40, 0
      %p133 = por %p131, %p132
      %p134 = scmp.ne.s32.totalorder %s126, %s128
      %p135 = scmp.eq.s32.totalorder %s45, 1
      %p136 = por %p134, %p135
      %p137 = scmp.ne.s32.totalorder %s128, %s129
      %p138 = scmp.eq.s32.totalorder %s45, 0
      %p139 = por %p137, %p138
      %p140 = scmp.ne.s32.totalorder %s128, %s129
      %p141 = scmp.eq.s32.totalorder %s46, 1
      %p142 = por %p140, %p141
      %p144 = scmp.ne.s32.totalorder %s129, %s143
      %p145 = scmp.eq.s32.totalorder %s46, 0
      %p146 = por %p144, %p145
      %s148 = sadd.s32 %s147, 1
      %p151 = scmp.eq.s32.totalorder %s40, 1
      %p152 = scmp.ne.s32.totalorder %s147, %s149
      %p153 = scmp.eq.s32.totalorder %s40, 0
      %p154 = por %p152, %p153
      %p155 = scmp.ne.s32.totalorder %s147, %s149
      %p156 = scmp.eq.s32.totalorder %s45, 1
      %p157 = por %p155, %p156
      %p158 = scmp.ne.s32.totalorder %s149, %s150
      %p159 = scmp.eq.s32.totalorder %s45, 0
      %p160 = por %p158, %p159
      %p161 = scmp.ne.s32.totalorder %s149, %s150
      %p162 = scmp.eq.s32.totalorder %s46, 1
      %p163 = por %p161, %p162
      %p165 = scmp.ne.s32.totalorder %s150, %s164
      %p166 = scmp.eq.s32.totalorder %s46, 0
      %p167 = por %p165, %p166
      %s169 = sadd.s32 %s168, 1
      %p172 = scmp.eq.s32.totalorder %s40, 1
      %p173 = scmp.ne.s32.totalorder %s168, %s170
      %p174 = scmp.eq.s32.totalorder %s40, 0
      %p175 = por %p173, %p174
      %p176 = scmp.ne.s32.totalorder %s168, %s170
      %p177 = scmp.eq.s32.totalorder %s45, 1
      %p178 = por %p176, %p177
      %p179 = scmp.ne.s32.totalorder %s170, %s171
      %p180 = scmp.eq.s32.totalorder %s45, 0
      %p181 = por %p179, %p180
      %p182 = scmp.ne.s32.totalorder %s170, %s171
      %p183 = scmp.eq.s32.totalorder %s46, 1
      %p184 = por %p182, %p183
      %p186 = scmp.ne.s32.totalorder %s171, %s185
      %p187 = scmp.eq.s32.totalorder %s46, 0
      %p188 = por %p186, %p187
      %s190 = sadd.s32 %s189, 1
      %p193 = scmp.eq.s32.totalorder %s40, 1
      %p194 = scmp.ne.s32.totalorder %s189, %s191
      %p195 = scmp.eq.s32.totalorder %s40, 0
      %p196 = por %p194, %p195
      %p197 = scmp.ne.s32.totalorder %s189, %s191
      %p198 = scmp.eq.s32.totalorder %s45, 1
      %p199 = por %p197, %p198
      %p200 = scmp.ne.s32.totalorder %s191, %s192
      %p201 = scmp.eq.s32.totalorder %s45, 0
      %p202 = por %p200, %p201
      %p203 = scmp.ne.s32.totalorder %s191, %s192
      %p204 = scmp.eq.s32.totalorder %s46, 1
      %p205 = por %p203, %p204
      %p207 = scmp.ne.s32.totalorder %s192, %s206
      %p208 = scmp.eq.s32.totalorder %s46, 0
      %p209 = por %p207, %p208
      %s211 = sadd.s32 %s210, 1
      %p214 = scmp.eq.s32.totalorder %s40, 1
      %p215 = scmp.ne.s32.totalorder %s210, %s212
      %p216 = scmp.eq.s32.totalorder %s40, 0
      %p217 = por %p215, %p216
      %p218 = scmp.ne.s32.totalorder %s210, %s212
      %p219 = scmp.eq.s32.totalorder %s45, 1
      %p220 = por %p218, %p219
      %p221 = scmp.ne.s32.totalorder %s212, %s213
      %p222 = scmp.eq.s32.totalorder %s45, 0
      %p223 = por %p221, %p222
      %p224 = scmp.ne.s32.totalorder %s212, %s213
      %p225 = scmp.eq.s32.totalorder %s46, 1
      %p226 = por %p224, %p225
      %p228 = scmp.ne.s32.totalorder %s213, %s227
      %p229 = scmp.eq.s32.totalorder %s46, 0
      %p230 = por %p228, %p229
      %s232 = sadd.s32 %s231, 1
      %p235 = scmp.eq.s32.totalorder %s40, 1
      %p236 = scmp.ne.s32.totalorder %s231, %s233
      %p237 = scmp.eq.s32.totalorder %s40, 0
      %p238 = por %p236, %p237
      %p239 = scmp.ne.s32.totalorder %s231, %s233
      %p240 = scmp.eq.s32.totalorder %s45, 1
      %p241 = por %p239, %p240
      %p242 = scmp.ne.s32.totalorder %s233, %s234
      %p243 = scmp.eq.s32.totalorder %s45, 0
      %p244 = por %p242, %p243
      %p245 = scmp.ne.s32.totalorder %s233, %s234
      %p246 = scmp.eq.s32.totalorder %s46, 1
      %p247 = por %p245, %p246
      %p249 = scmp.ne.s32.totalorder %s234, %s248
      %p250 = scmp.eq.s32.totalorder %s46, 0
      %p251 = por %p249, %p250
      %s253 = sadd.s32 %s252, 1
      %p256 = scmp.eq.s32.totalorder %s40, 1
      %p257 = scmp.ne.s32.totalorder %s252, %s254
      %p258 = scmp.eq.s32.totalorder %s40, 0
      %p259 = por %p257, %p258
      %p260 = scmp.ne.s32.totalorder %s252, %s254
      %p261 = scmp.eq.s32.totalorder %s45, 1
      %p262 = por %p260, %p261
      %p263 = scmp.ne.s32.totalorder %s254, %s255
      %p264 = scmp.eq.s32.totalorder %s45, 0
      %p265 = por %p263, %p264
      %p266 = scmp.ne.s32.totalorder %s254, %s255
      %p267 = scmp.eq.s32.totalorder %s46, 1
      %p268 = por %p266, %p267
      %p270 = scmp.ne.s32.totalorder %s255, %s269
      %p271 = scmp.eq.s32.totalorder %s46, 0
      %p272 = por %p270, %p271
      %s274 = sadd.s32 %s273, 1
      %p277 = scmp.eq.s32.totalorder %s40, 1
      %p278 = scmp.ne.s32.totalorder %s273, %s275
      %p279 = scmp.eq.s32.totalorder %s40, 0
      %p280 = por %p278, %p279
      %p281 = scmp.ne.s32.totalorder %s273, %s275
      %p282 = scmp.eq.s32.totalorder %s45, 1
      %p283 = por %p281, %p282
      %p284 = scmp.ne.s32.totalorder %s275, %s276
      %p285 = scmp.eq.s32.totalorder %s45, 0
      %p286 = por %p284, %p285
      %p287 = scmp.ne.s32.totalorder %s275, %s276
      %p288 = scmp.eq.s32.totalorder %s46, 1
      %p289 = por %p287, %p288
      %p291 = scmp.ne.s32.totalorder %s276, %s290
      %p292 = scmp.eq.s32.totalorder %s46, 0
      %p293 = por %p291, %p292
      %s295 = sadd.s32 %s294, 1
      %p298 = scmp.eq.s32.totalorder %s40, 1
      %p299 = scmp.ne.s32.totalorder %s294, %s296
      %p300 = scmp.eq.s32.totalorder %s40, 0
      %p301 = por %p299, %p300
      %p302 = scmp.ne.s32.totalorder %s294, %s296
      %p303 = scmp.eq.s32.totalorder %s45, 1
      %p304 = por %p302, %p303
      %p305 = scmp.ne.s32.totalorder %s296, %s297
      %p306 = scmp.eq.s32.totalorder %s45, 0
      %p307 = por %p305, %p306
      %p308 = scmp.ne.s32.totalorder %s296, %s297
      %p309 = scmp.eq.s32.totalorder %s46, 1
      %p310 = por %p308, %p309
      %p312 = scmp.ne.s32.totalorder %s297, %s311
      %p313 = scmp.eq.s32.totalorder %s46, 0
      %p314 = por %p312, %p313
      %s316 = sadd.s32 %s315, 1
      %p319 = scmp.eq.s32.totalorder %s40, 1
      %p320 = scmp.ne.s32.totalorder %s315, %s317
      %p321 = scmp.eq.s32.totalorder %s40, 0
      %p322 = por %p320, %p321
      %p323 = scmp.ne.s32.totalorder %s315, %s317
      %p324 = scmp.eq.s32.totalorder %s45, 1
      %p325 = por %p323, %p324
      %p326 = scmp.ne.s32.totalorder %s317, %s318
      %p327 = scmp.eq.s32.totalorder %s45, 0
      %p328 = por %p326, %p327
      %p329 = scmp.ne.s32.totalorder %s317, %s318
      %p330 = scmp.eq.s32.totalorder %s46, 1
      %p331 = por %p329, %p330
      %p333 = scmp.ne.s32.totalorder %s318, %s332
      %p334 = scmp.eq.s32.totalorder %s46, 0
      %p335 = por %p333, %p334
      %s337 = sadd.s32 %s336, 1
      %p340 = scmp.eq.s32.totalorder %s40, 1
      %p341 = scmp.ne.s32.totalorder %s336, %s338
      %p342 = scmp.eq.s32.totalorder %s40, 0
      %p343 = por %p341, %p342
      %p344 = scmp.ne.s32.totalorder %s336, %s338
      %p345 = scmp.eq.s32.totalorder %s45, 1
      %p346 = por %p344, %p345
      %p347 = scmp.ne.s32.totalorder %s338, %s339
      %p348 = scmp.eq.s32.totalorder %s45, 0
      %p349 = por %p347, %p348
      %p350 = scmp.ne.s32.totalorder %s338, %s339
      %p351 = scmp.eq.s32.totalorder %s46, 1
      %p352 = por %p350, %p351
      %p354 = scmp.ne.s32.totalorder %s339, %s353
      %p355 = scmp.eq.s32.totalorder %s46, 0
      %p356 = por %p354, %p355
      %s358 = sadd.s32 %s357, 1
      %p361 = scmp.eq.s32.totalorder %s40, 1
      %p362 = scmp.ne.s32.totalorder %s357, %s359
      %p363 = scmp.eq.s32.totalorder %s40, 0
      %p364 = por %p362, %p363
      %p365 = scmp.ne.s32.totalorder %s357, %s359
      %p366 = scmp.eq.s32.totalorder %s45, 1
      %p367 = por %p365, %p366
      %p368 = scmp.ne.s32.totalorder %s359, %s360
      %p369 = scmp.eq.s32.totalorder %s45, 0
      %p370 = por %p368, %p369
      %p371 = scmp.ne.s32.totalorder %s359, %s360
      %p372 = scmp.eq.s32.totalorder %s46, 1
      %p373 = por %p371, %p372
      %p375 = scmp.ne.s32.totalorder %s360, %s374
      %p376 = scmp.eq.s32.totalorder %s46, 0
      %p377 = por %p375, %p376
      %s379 = sadd.s32 %s378, 1
      %p382 = scmp.eq.s32.totalorder %s40, 1
      %p383 = scmp.ne.s32.totalorder %s378, %s380
      %p384 = scmp.eq.s32.totalorder %s40, 0
      %p385 = por %p383, %p384
      %p386 = scmp.ne.s32.totalorder %s378, %s380
      %p387 = scmp.eq.s32.totalorder %s45, 1
      %p388 = por %p386, %p387
      %p389 = scmp.ne.s32.totalorder %s380, %s381
      %p390 = scmp.eq.s32.totalorder %s45, 0
      %p391 = por %p389, %p390
      %p392 = scmp.ne.s32.totalorder %s380, %s381
      %p393 = scmp.eq.s32.totalorder %s46, 1
      %p394 = por %p392, %p393
      %p396 = scmp.ne.s32.totalorder %s381, %s395
      %p397 = scmp.eq.s32.totalorder %s46, 0
      %p398 = por %p396, %p397
      %s400 = sadd.s32 %s399, 1
      %p403 = scmp.eq.s32.totalorder %s40, 1
      %p404 = scmp.ne.s32.totalorder %s399, %s401
      %p405 = scmp.eq.s32.totalorder %s40, 0
      %p406 = por %p404, %p405
      %p407 = scmp.ne.s32.totalorder %s399, %s401
      %p408 = scmp.eq.s32.totalorder %s45, 1
      %p409 = por %p407, %p408
      %p410 = scmp.ne.s32.totalorder %s401, %s402
      %p411 = scmp.eq.s32.totalorder %s45, 0
      %p412 = por %p410, %p411
      %p413 = scmp.ne.s32.totalorder %s401, %s402
      %p414 = scmp.eq.s32.totalorder %s46, 1
      %p415 = por %p413, %p414
      %p417 = scmp.ne.s32.totalorder %s402, %s416
      %p418 = scmp.eq.s32.totalorder %s46, 0
      %p419 = por %p417, %p418
      %s421 = sadd.s32 %s420, 1
      %p424 = scmp.eq.s32.totalorder %s40, 1
      %p425 = scmp.ne.s32.totalorder %s420, %s422
      %p426 = scmp.eq.s32.totalorder %s40, 0
      %p427 = por %p425, %p426
      %p428 = scmp.ne.s32.totalorder %s420, %s422
      %p429 = scmp.eq.s32.totalorder %s45, 1
      %p430 = por %p428, %p429
      %p431 = scmp.ne.s32.totalorder %s422, %s423
      %p432 = scmp.eq.s32.totalorder %s45, 0
      %p433 = por %p431, %p432
      %p434 = scmp.ne.s32.totalorder %s422, %s423
      %p435 = scmp.eq.s32.totalorder %s46, 1
      %p436 = por %p434, %p435
      %p438 = scmp.ne.s32.totalorder %s423, %s437
      %p439 = scmp.eq.s32.totalorder %s46, 0
      %p440 = por %p438, %p439
      %s442 = sadd.s32 %s441, 1
      %p445 = scmp.eq.s32.totalorder %s40, 1
      %p446 = scmp.ne.s32.totalorder %s441, %s443
      %p447 = scmp.eq.s32.totalorder %s40, 0
      %p448 = por %p446, %p447
      %p449 = scmp.ne.s32.totalorder %s441, %s443
      %p450 = scmp.eq.s32.totalorder %s45, 1
      %p451 = por %p449, %p450
      %p452 = scmp.ne.s32.totalorder %s443, %s444
      %p453 = scmp.eq.s32.totalorder %s45, 0
      %p454 = por %p452, %p453
      %p455 = scmp.ne.s32.totalorder %s443, %s444
      %p456 = scmp.eq.s32.totalorder %s46, 1
      %p457 = por %p455, %p456
      %p459 = scmp.ne.s32.totalorder %s444, %s458
      %p460 = scmp.eq.s32.totalorder %s46, 0
      %p461 = por %p459, %p460
      %s463 = sadd.s32 %s462, 1
      %p466 = scmp.eq.s32.totalorder %s40, 1
      %p467 = scmp.ne.s32.totalorder %s462, %s464
      %p468 = scmp.eq.s32.totalorder %s40, 0
      %p469 = por %p467, %p468
      %p470 = scmp.ne.s32.totalorder %s462, %s464
      %p471 = scmp.eq.s32.totalorder %s45, 1
      %p472 = por %p470, %p471
      %p473 = scmp.ne.s32.totalorder %s464, %s465
      %p474 = scmp.eq.s32.totalorder %s45, 0
      %p475 = por %p473, %p474
      %p476 = scmp.ne.s32.totalorder %s464, %s465
      %p477 = scmp.eq.s32.totalorder %s46, 1
      %p478 = por %p476, %p477
      %p480 = scmp.ne.s32.totalorder %s465, %s479
      %p481 = scmp.eq.s32.totalorder %s46, 0
      %p482 = por %p480, %p481
      %s484 = sadd.s32 %s483, 1
      %p487 = scmp.eq.s32.totalorder %s40, 1
      %p488 = scmp.ne.s32.totalorder %s483, %s485
      %p489 = scmp.eq.s32.totalorder %s40, 0
      %p490 = por %p488, %p489
      %p491 = scmp.ne.s32.totalorder %s483, %s485
      %p492 = scmp.eq.s32.totalorder %s45, 1
      %p493 = por %p491, %p492
      %p494 = scmp.ne.s32.totalorder %s485, %s486
      %p495 = scmp.eq.s32.totalorder %s45, 0
      %p496 = por %p494, %p495
      %p497 = scmp.ne.s32.totalorder %s485, %s486
      %p498 = scmp.eq.s32.totalorder %s46, 1
      %p499 = por %p497, %p498
      %p501 = scmp.ne.s32.totalorder %s486, %s500
      %p502 = scmp.eq.s32.totalorder %s46, 0
      %p503 = por %p501, %p502
      %s505 = sadd.s32 %s504, 1
      %p508 = scmp.eq.s32.totalorder %s40, 1
      %p509 = scmp.ne.s32.totalorder %s504, %s506
      %p510 = scmp.eq.s32.totalorder %s40, 0
      %p511 = por %p509, %p510
      %p512 = scmp.ne.s32.totalorder %s504, %s506
      %p513 = scmp.eq.s32.totalorder %s45, 1
      %p514 = por %p512, %p513
      %p515 = scmp.ne.s32.totalorder %s506, %s507
      %p516 = scmp.eq.s32.totalorder %s45, 0
      %p517 = por %p515, %p516
      %p518 = scmp.ne.s32.totalorder %s506, %s507
      %p519 = scmp.eq.s32.totalorder %s46, 1
      %p520 = por %p518, %p519
      %p522 = scmp.ne.s32.totalorder %s507, %s521
      %p523 = scmp.eq.s32.totalorder %s46, 0
      %p524 = por %p522, %p523
      %s526 = sadd.s32 %s525, 1
      %p529 = scmp.eq.s32.totalorder %s40, 1
      %p530 = scmp.ne.s32.totalorder %s525, %s527
      %p531 = scmp.eq.s32.totalorder %s40, 0
      %p532 = por %p530, %p531
      %p533 = scmp.ne.s32.totalorder %s525, %s527
      %p534 = scmp.eq.s32.totalorder %s45, 1
      %p535 = por %p533, %p534
      %p536 = scmp.ne.s32.totalorder %s527, %s528
      %p537 = scmp.eq.s32.totalorder %s45, 0
      %p538 = por %p536, %p537
      %p539 = scmp.ne.s32.totalorder %s527, %s528
      %p540 = scmp.eq.s32.totalorder %s46, 1
      %p541 = por %p539, %p540
      %p543 = scmp.ne.s32.totalorder %s528, %s542
      %p544 = scmp.eq.s32.totalorder %s46, 0
      %p545 = por %p543, %p544
      %s546 = ssub.s32 %s40, %s47
      %p547 = scmp.eq.s32.totalorder %s546, 0
      %s549 = sadd.s32 %s548, 1
      %s550 = scalar_select %p547, %s548, %s549
      %p553 = pneg %p547
      %p554 = scmp.eq.s32.totalorder %s40, 1
      %p555 = por %p553, %p554
      %p556 = scmp.ne.s32.totalorder %s548, %s551
      %p557 = scmp.eq.s32.totalorder %s40, 0
      %p558 = por %p556, %p557
      %p559 = scmp.ne.s32.totalorder %s548, %s551
      %p560 = scmp.eq.s32.totalorder %s45, 1
      %p561 = por %p559, %p560
      %p562 = scmp.ne.s32.totalorder %s551, %s552
      %p563 = scmp.eq.s32.totalorder %s45, 0
      %p564 = por %p562, %p563
      %p565 = scmp.ne.s32.totalorder %s551, %s552
      %p566 = scmp.eq.s32.totalorder %s46, 1
      %p567 = por %p565, %p566
      %p569 = scmp.ne.s32.totalorder %s552, %s568
      %p570 = scmp.eq.s32.totalorder %s46, 0
      %p571 = por %p569, %p570
      %p572 = scmp.le.s32.totalorder 1, %s40
      %p573 = scmp.lt.s32.totalorder %s40, 3
      %p574 = pnand %p572, %p573
      %p575 = pneg %p574
      // Predicated region
      $region9: #{decoder_layer.1} parent=5 // pred_check
        _
      $region10: #{decoder_layer.1} parent=5 // pred_check_branch
        %577 = sbr.rel (%p574) target = $region12
      $region11: #{decoder_layer.1} parent=5 // pred_region
        %s578 = ssub.s32 %s40, 1
        // Predicated region
        $region13: #{decoder_layer.1} parent=11 // pred_check
          %p579 = pneg %p139
        $region14: #{decoder_layer.1} parent=11 // pred_check_branch
          %581 = sbr.rel (%p579) target = $region16
        $region15: #{decoder_layer.1} parent=11 // pred_region
          _
        $region16: #{decoder_layer.1} parent=11 // pred_fallthru
          _
        // Predicated region
        $region17: #{decoder_layer.1} parent=11 // pred_check
          %p582 = pneg %p160
        $region18: #{decoder_layer.1} parent=11 // pred_check_branch
          %584 = sbr.rel (%p582) target = $region20
        $region19: #{decoder_layer.1} parent=11 // pred_region
          _
        $region20: #{decoder_layer.1} parent=11 // pred_fallthru
          _
        // Predicated region
        $region21: #{decoder_layer.1} parent=11 // pred_check
          %p585 = pneg %p181
        $region22: #{decoder_layer.1} parent=11 // pred_check_branch
          %587 = sbr.rel (%p585) target = $region24
        $region23: #{decoder_layer.1} parent=11 // pred_region
          _
        $region24: #{decoder_layer.1} parent=11 // pred_fallthru
          _
        // Predicated region
        $region25: #{decoder_layer.1} parent=11 // pred_check
          %p588 = pneg %p202
        $region26: #{decoder_layer.1} parent=11 // pred_check_branch
          %590 = sbr.rel (%p588) target = $region28
        $region27: #{decoder_layer.1} parent=11 // pred_region
          _
        $region28: #{decoder_layer.1} parent=11 // pred_fallthru
          _
        // Predicated region
        $region29: #{decoder_layer.1} parent=11 // pred_check
          %p591 = pneg %p223
        $region30: #{decoder_layer.1} parent=11 // pred_check_branch
          %593 = sbr.rel (%p591) target = $region32
        $region31: #{decoder_layer.1} parent=11 // pred_region
          _
        $region32: #{decoder_layer.1} parent=11 // pred_fallthru
          _
        // Predicated region
        $region33: #{decoder_layer.1} parent=11 // pred_check
          %p594 = pneg %p244
        $region34: #{decoder_layer.1} parent=11 // pred_check_branch
          %596 = sbr.rel (%p594) target = $region36
        $region35: #{decoder_layer.1} parent=11 // pred_region
          _
        $region36: #{decoder_layer.1} parent=11 // pred_fallthru
          _
        // Predicated region
        $region37: #{decoder_layer.1} parent=11 // pred_check
          %p597 = pneg %p265
        $region38: #{decoder_layer.1} parent=11 // pred_check_branch
          %599 = sbr.rel (%p597) target = $region40
        $region39: #{decoder_layer.1} parent=11 // pred_region
          %601 = vsyncadd [#allocation6], 0
          %s602 = sshll.u32 %s9, 4
          %s603 = int_to_ptr.hbm [resolvable:$true] %s602
          %s604 = sshll.u32 [#allocation5], 4
          %s605 = int_to_ptr.vmem [resolvable:$true] %s604
          %610 = dma.hbm_to_vmem [thread:$0]  %s603, 512, %s605, [#allocation6], 128, 128, 8
        $region40: #{decoder_layer.1} parent=11 // pred_fallthru
          _
        // Predicated region
        $region41: #{decoder_layer.1} parent=11 // pred_check
          %p611 = pneg %p286
        $region42: #{decoder_layer.1} parent=11 // pred_check_branch
          %613 = sbr.rel (%p611) target = $region44
        $region43: #{decoder_layer.1} parent=11 // pred_region
          _
        $region44: #{decoder_layer.1} parent=11 // pred_fallthru
          _
        // Predicated region
        $region45: #{decoder_layer.1} parent=11 // pred_check
          %p614 = pneg %p307
        $region46: #{decoder_layer.1} parent=11 // pred_check_branch
          %616 = sbr.rel (%p614) target = $region48
        $region47: #{decoder_layer.1} parent=11 // pred_region
          %618 = vsyncadd [#allocation6], 0
          %s619 = sshll.u32 %s11, 4
          %s620 = int_to_ptr.hbm [resolvable:$true] %s619
          %s621 = sshll.u32 [#allocation7], 4
          %s622 = int_to_ptr.vmem [resolvable:$true] %s621
          %627 = dma.hbm_to_vmem [thread:$0]  %s620, 512, %s622, [#allocation6], 128, 128, 8
        $region48: #{decoder_layer.1} parent=11 // pred_fallthru
          _
        // Predicated region
        $region49: #{decoder_layer.1} parent=11 // pred_check
          %p628 = pneg %p328
        $region50: #{decoder_layer.1} parent=11 // pred_check_branch
          %630 = sbr.rel (%p628) target = $region52
        $region51: #{decoder_layer.1} parent=11 // pred_region
          _
        $region52: #{decoder_layer.1} parent=11 // pred_fallthru
          _
        // Predicated region
        $region53: #{decoder_layer.1} parent=11 // pred_check
          %p631 = pneg %p349
        $region54: #{decoder_layer.1} parent=11 // pred_check_branch
          %633 = sbr.rel (%p631) target = $region56
        $region55: #{decoder_layer.1} parent=11 // pred_region
          %635 = vsyncadd [#allocation9], 0
          %s636 = sshll.u32 %s13, 4
          %s637 = int_to_ptr.hbm [resolvable:$true] %s636
          %s638 = sshll.u32 [#allocation8], 4
          %s639 = int_to_ptr.vmem [resolvable:$true] %s638
          %644 = dma.hbm_to_vmem [thread:$0]  %s637, 512, %s639, [#allocation9], 128, 128, 8
        $region56: #{decoder_layer.1} parent=11 // pred_fallthru
          _
        // Predicated region
        $region57: #{decoder_layer.1} parent=11 // pred_check
          %p645 = pneg %p370
        $region58: #{decoder_layer.1} parent=11 // pred_check_branch
          %647 = sbr.rel (%p645) target = $region60
        $region59: #{decoder_layer.1} parent=11 // pred_region
          _
        $region60: #{decoder_layer.1} parent=11 // pred_fallthru
          _
        // Predicated region
        $region61: #{decoder_layer.1} parent=11 // pred_check
          %p648 = pneg %p391
        $region62: #{decoder_layer.1} parent=11 // pred_check_branch
          %650 = sbr.rel (%p648) target = $region64
        $region63: #{decoder_layer.1} parent=11 // pred_region
          %652 = vsyncadd [#allocation9], 0
          %s654 = sshll.u32 %s15, 4
          %s655 = int_to_ptr.hbm [resolvable:$true] %s654
          %s656 = sshll.u32 [#allocation10], 4
          %s657 = int_to_ptr.vmem [resolvable:$true] %s656
          %659 = dma.hbm_to_vmem [thread:$0]  %s655, 16, %s657, [#allocation9]
        $region64: #{decoder_layer.1} parent=11 // pred_fallthru
          _
        // Predicated region
        $region65: #{decoder_layer.1} parent=11 // pred_check
          %p660 = pneg %p412
        $region66: #{decoder_layer.1} parent=11 // pred_check_branch
          %662 = sbr.rel (%p660) target = $region68
        $region67: #{decoder_layer.1} parent=11 // pred_region
          %664 = vsyncadd [#allocation12], 0
          %s666 = sshll.u32 %s16, 4
          %s667 = int_to_ptr.hbm [resolvable:$true] %s666
          %s668 = sshll.u32 [#allocation11], 4
          %s669 = int_to_ptr.vmem [resolvable:$true] %s668
          %671 = dma.hbm_to_vmem [thread:$0]  %s667, 16, %s669, [#allocation12]
        $region68: #{decoder_layer.1} parent=11 // pred_fallthru
          _
        // Predicated region
        $region69: #{decoder_layer.1} parent=11 // pred_check
          %p672 = pneg %p433
        $region70: #{decoder_layer.1} parent=11 // pred_check_branch
          %674 = sbr.rel (%p672) target = $region72
        $region71: #{decoder_layer.1} parent=11 // pred_region
          %676 = vsyncadd [#allocation12], 0
          %s677 = sshll.u32 %s17, 4
          %s678 = int_to_ptr.hbm [resolvable:$true] %s677
          %s679 = sshll.u32 [#allocation13], 4
          %s680 = int_to_ptr.vmem [resolvable:$true] %s679
          %685 = dma.hbm_to_vmem [thread:$0]  %s678, 512, %s680, [#allocation12], 128, 128, 8
        $region72: #{decoder_layer.1} parent=11 // pred_fallthru
          _
        // Predicated region
        $region73: #{decoder_layer.1} parent=11 // pred_check
          %p686 = pneg %p454
        $region74: #{decoder_layer.1} parent=11 // pred_check_branch
          %688 = sbr.rel (%p686) target = $region76
        $region75: #{decoder_layer.1} parent=11 // pred_region
          %690 = vsyncadd [#allocation15], 0
          %s692 = sshll.u32 %s18, 4
          %s693 = int_to_ptr.hbm [resolvable:$true] %s692
          %s694 = sshll.u32 [#allocation14], 4
          %s695 = int_to_ptr.vmem [resolvable:$true] %s694
          %697 = dma.hbm_to_vmem [thread:$0]  %s693, 16, %s695, [#allocation15]
        $region76: #{decoder_layer.1} parent=11 // pred_fallthru
          _
        // Predicated region
        $region77: #{decoder_layer.1} parent=11 // pred_check
          %p698 = pneg %p475
        $region78: #{decoder_layer.1} parent=11 // pred_check_branch
          %700 = sbr.rel (%p698) target = $region80
        $region79: #{decoder_layer.1} parent=11 // pred_region
          _
        $region80: #{decoder_layer.1} parent=11 // pred_fallthru
          _
        // Predicated region
        $region81: #{decoder_layer.1} parent=11 // pred_check
          %p701 = pneg %p496
        $region82: #{decoder_layer.1} parent=11 // pred_check_branch
          %703 = sbr.rel (%p701) target = $region84
        $region83: #{decoder_layer.1} parent=11 // pred_region
          %705 = vsyncadd [#allocation15], 0
          %s707 = sshll.u32 %s20, 4
          %s708 = int_to_ptr.hbm [resolvable:$true] %s707
          %s709 = sshll.u32 [#allocation16], 4
          %s710 = int_to_ptr.vmem [resolvable:$true] %s709
          %712 = dma.hbm_to_vmem [thread:$0]  %s708, 16, %s710, [#allocation15]
        $region84: #{decoder_layer.1} parent=11 // pred_fallthru
          _
        // Predicated region
        $region85: #{decoder_layer.1} parent=11 // pred_check
          %p713 = pneg %p517
        $region86: #{decoder_layer.1} parent=11 // pred_check_branch
          %715 = sbr.rel (%p713) target = $region88
        $region87: #{decoder_layer.1} parent=11 // pred_region
          %717 = vsyncadd [#allocation18], 0
          %s719 = sshll.u32 %s21, 4
          %s720 = int_to_ptr.hbm [resolvable:$true] %s719
          %s721 = sshll.u32 [#allocation17], 4
          %s722 = int_to_ptr.vmem [resolvable:$true] %s721
          %724 = dma.hbm_to_vmem [thread:$0]  %s720, 16, %s722, [#allocation18]
        $region88: #{decoder_layer.1} parent=11 // pred_fallthru
          _
        // Predicated region
        $region89: #{decoder_layer.1} parent=11 // pred_check
          %p725 = pneg %p538
        $region90: #{decoder_layer.1} parent=11 // pred_check_branch
          %727 = sbr.rel (%p725) target = $region92
        $region91: #{decoder_layer.1} parent=11 // pred_region
          %729 = vsyncadd [#allocation18], 0
          %s731 = sshll.u32 %s22, 4
          %s732 = int_to_ptr.hbm [resolvable:$true] %s731
          %s733 = sshll.u32 [#allocation19], 4
          %s734 = int_to_ptr.vmem [resolvable:$true] %s733
          %736 = dma.hbm_to_vmem [thread:$0]  %s732, 16, %s734, [#allocation18]
        $region92: #{decoder_layer.1} parent=11 // pred_fallthru
          _
      $region12: #{decoder_layer.1} parent=5 // pred_fallthru
        _
      %p737 = scmp.lt.s32.totalorder %s40, 2
      // Predicated region
      $region93: #{decoder_layer.1} parent=5 // pred_check
        %p738 = pneg %p737
      $region94: #{decoder_layer.1} parent=5 // pred_check_branch
        %740 = sbr.rel (%p738) target = $region96
      $region95: #{decoder_layer.1} parent=5 // pred_region
        // Predicated region
        $region97: #{decoder_layer.1} parent=95 // pred_check
          %p741 = pneg %p60
        $region98: #{decoder_layer.1} parent=95 // pred_check_branch
          %743 = sbr.rel (%p741) target = $region100
        $region99: #{decoder_layer.1} parent=95 // pred_region
          %s744 = sand.u32 %s50, 1
          %s745 = scalar_lea.sflag [#allocation3], %s744
          %s746 = sand.u32 %s50, 1
          %s747 = smul.addr %s746, 8
          %s748 = scalar_lea.vmem [#allocation2], %s747
          %750 = vsyncadd %s745, 0
          %s751 = smul.addr %s40, 8
          %s752 = scalar_lea.hbm %s0, %s751
          %s754 = sshll.u32 %s752, 4
          %s755 = int_to_ptr.hbm [resolvable:$true] %s754
          %s756 = sshll.u32 %s748, 4
          %s757 = int_to_ptr.vmem [resolvable:$true] %s756
          %759 = dma.hbm_to_vmem [thread:$0]  %s755, 128, %s757, %s745
        $region100: #{decoder_layer.1} parent=95 // pred_fallthru
          _
        // Predicated region
        $region101: #{decoder_layer.1} parent=95 // pred_check
          %p760 = pneg %p86
        $region102: #{decoder_layer.1} parent=95 // pred_check_branch
          %762 = sbr.rel (%p760) target = $region104
        $region103: #{decoder_layer.1} parent=95 // pred_region
          %s763 = smul.u32 2, %s40
          %p764 = scmp.lt.s32.totalorder %s763, 3
          %s765 = scalar_select %p764, %s763, 3
          %s766 = smul.addr %s765, 8
          %s767 = scalar_lea.vmem %s1, %s766
          %s768 = smul.u32 2, %s40
        $region104: #{decoder_layer.1} parent=95 // pred_fallthru
          _
        // Predicated region
        $region105: #{decoder_layer.1} parent=95 // pred_check
          %p769 = pneg %p112
        $region106: #{decoder_layer.1} parent=95 // pred_check_branch
          %771 = sbr.rel (%p769) target = $region108
        $region107: #{decoder_layer.1} parent=95 // pred_region
          %p772 = scmp.lt.s32.totalorder %s40, 1
          %s773 = scalar_select %p772, %s40, 1
          %s774 = smul.addr %s773, 8
          %s775 = scalar_lea.vmem %s2, %s774
        $region108: #{decoder_layer.1} parent=95 // pred_fallthru
          _
      $region96: #{decoder_layer.1} parent=5 // pred_fallthru
        _
      %p776 = scmp.le.s32.totalorder 1, %s40
      %p777 = scmp.lt.s32.totalorder %s40, 3
      %p778 = pnand %p776, %p777
      %p779 = pneg %p778
      // Predicated region
      $region109: #{decoder_layer.1} parent=5 // pred_check
        _
      $region110: #{decoder_layer.1} parent=5 // pred_check_branch
        %781 = sbr.rel (%p778) target = $region112
      $region111: #{decoder_layer.1} parent=5 // pred_region
        %s782 = ssub.s32 %s40, 1
        %s783 = sand.u32 %s53, 1
        %s784 = scalar_lea.sflag [#allocation3], %s783
        %s785 = sand.u32 %s53, 1
        %s786 = smul.addr %s785, 8
        %s787 = scalar_lea.vmem [#allocation2], %s786
        // Predicated region
        $region113: #{decoder_layer.1} parent=111 // pred_check
          %p788 = pneg %p66
        $region114: #{decoder_layer.1} parent=111 // pred_check_branch
          %790 = sbr.rel (%p788) target = $region116
        $region115: #{decoder_layer.1} parent=111 // pred_region
          %792 = dma.done %s784, 128
        $region116: #{decoder_layer.1} parent=111 // pred_fallthru
          _
        // Predicated region
        $region117: #{decoder_layer.1} parent=111 // pred_check
          %p793 = pneg %p265
        $region118: #{decoder_layer.1} parent=111 // pred_check_branch
          %795 = sbr.rel (%p793) target = $region120
        $region119: #{decoder_layer.1} parent=111 // pred_region
          %797 = dma.done [#allocation6], 512
        $region120: #{decoder_layer.1} parent=111 // pred_fallthru
          _
        // Predicated region
        $region121: #{decoder_layer.1} parent=111 // pred_check
          %p798 = pneg %p307
        $region122: #{decoder_layer.1} parent=111 // pred_check_branch
          %800 = sbr.rel (%p798) target = $region124
        $region123: #{decoder_layer.1} parent=111 // pred_region
          %802 = dma.done [#allocation6], 512
        $region124: #{decoder_layer.1} parent=111 // pred_fallthru
          _
        // Predicated region
        $region125: #{decoder_layer.1} parent=111 // pred_check
          %p803 = pneg %p349
        $region126: #{decoder_layer.1} parent=111 // pred_check_branch
          %805 = sbr.rel (%p803) target = $region128
        $region127: #{decoder_layer.1} parent=111 // pred_region
          %807 = dma.done [#allocation9], 512
        $region128: #{decoder_layer.1} parent=111 // pred_fallthru
          _
        // Predicated region
        $region129: #{decoder_layer.1} parent=111 // pred_check
          %p808 = pneg %p391
        $region130: #{decoder_layer.1} parent=111 // pred_check_branch
          %810 = sbr.rel (%p808) target = $region132
        $region131: #{decoder_layer.1} parent=111 // pred_region
          %812 = dma.done [#allocation9], 16
        $region132: #{decoder_layer.1} parent=111 // pred_fallthru
          _
        // Predicated region
        $region133: #{decoder_layer.1} parent=111 // pred_check
          %p813 = pneg %p412
        $region134: #{decoder_layer.1} parent=111 // pred_check_branch
          %815 = sbr.rel (%p813) target = $region136
        $region135: #{decoder_layer.1} parent=111 // pred_region
          %817 = dma.done [#allocation12], 16
        $region136: #{decoder_layer.1} parent=111 // pred_fallthru
          _
        // Predicated region
        $region137: #{decoder_layer.1} parent=111 // pred_check
          %p818 = pneg %p433
        $region138: #{decoder_layer.1} parent=111 // pred_check_branch
          %820 = sbr.rel (%p818) target = $region140
        $region139: #{decoder_layer.1} parent=111 // pred_region
          %822 = dma.done [#allocation12], 512
        $region140: #{decoder_layer.1} parent=111 // pred_fallthru
          _
        // Predicated region
        $region141: #{decoder_layer.1} parent=111 // pred_check
          %p823 = pneg %p454
        $region142: #{decoder_layer.1} parent=111 // pred_check_branch
          %825 = sbr.rel (%p823) target = $region144
        $region143: #{decoder_layer.1} parent=111 // pred_region
          %827 = dma.done [#allocation15], 16
        $region144: #{decoder_layer.1} parent=111 // pred_fallthru
          _
        // Predicated region
        $region145: #{decoder_layer.1} parent=111 // pred_check
          %p828 = pneg %p496
        $region146: #{decoder_layer.1} parent=111 // pred_check_branch
          %830 = sbr.rel (%p828) target = $region148
        $region147: #{decoder_layer.1} parent=111 // pred_region
          %832 = dma.done [#allocation15], 16
        $region148: #{decoder_layer.1} parent=111 // pred_fallthru
          _
        // Predicated region
        $region149: #{decoder_layer.1} parent=111 // pred_check
          %p833 = pneg %p517
        $region150: #{decoder_layer.1} parent=111 // pred_check_branch
          %835 = sbr.rel (%p833) target = $region152
        $region151: #{decoder_layer.1} parent=111 // pred_region
          %837 = dma.done [#allocation18], 16
        $region152: #{decoder_layer.1} parent=111 // pred_fallthru
          _
        // Predicated region
        $region153: #{decoder_layer.1} parent=111 // pred_check
          %p838 = pneg %p538
        $region154: #{decoder_layer.1} parent=111 // pred_check_branch
          %840 = sbr.rel (%p838) target = $region156
        $region155: #{decoder_layer.1} parent=111 // pred_region
          %842 = dma.done [#allocation18], 16
        $region156: #{decoder_layer.1} parent=111 // pred_fallthru
          _
        %s843 = sand.u32 %s53, 1
        %s844 = scalar_lea.sflag [#allocation3], %s843
        %s845 = sand.u32 %s53, 1
        %s846 = smul.addr %s845, 8
        %s847 = scalar_lea.vmem [#allocation2], %s846
        %p848 = pneg %p66
        %p849 = pneg %p63
        %s850 = smul.u32 2, %s45
        %p851 = scmp.lt.s32.totalorder %s850, 3
        %s852 = scalar_select %p851, %s850, 3
        %s853 = smul.addr %s852, 8
        %s854 = scalar_lea.vmem %s1, %s853
        %p855 = pneg %p92
        %p856 = pneg %p89
        %p857 = scmp.lt.s32.totalorder %s45, 1
        %s858 = scalar_select %p857, %s45, 1
        %s859 = smul.addr %s858, 8
        %s860 = scalar_lea.vmem %s2, %s859
        %p861 = pneg %p118
        %p862 = pneg %p115
        %p863 = pneg %p139
        %p864 = pneg %p136
        %p865 = pneg %p160
        %p866 = pneg %p157
        %p867 = pneg %p181
        %p868 = pneg %p178
        %p869 = pneg %p202
        %p870 = pneg %p199
        %p871 = pneg %p223
        %p872 = pneg %p220
        %p873 = pneg %p244
        %p874 = pneg %p241
        %p875 = pneg %p265
        %p876 = pneg %p262
        %p877 = pneg %p286
        %p878 = pneg %p283
        %p879 = pneg %p307
        %p880 = pneg %p304
        %p881 = pneg %p328
        %p882 = pneg %p325
        %p883 = pneg %p349
        %p884 = pneg %p346
        %p885 = pneg %p370
        %p886 = pneg %p367
        %p887 = pneg %p391
        %p888 = pneg %p388
        %p889 = pneg %p412
        %p890 = pneg %p409
        %p891 = pneg %p433
        %p892 = pneg %p430
        %p893 = pneg %p454
        %p894 = pneg %p451
        %p895 = pneg %p475
        %p896 = pneg %p472
        %p897 = pneg %p496
        %p898 = pneg %p493
        %p899 = pneg %p517
        %p900 = pneg %p514
        %p901 = pneg %p538
        %p902 = pneg %p535
        %p903 = pneg %p564
        %p904 = pneg %p561
        %s905 = sand.u32 %s551, 1
        %s906 = scalar_lea.sflag [#allocation4], %s905
        %s907 = sand.u32 %s551, 1
        %s908 = smul.addr %s907, 8
        %s909 = scalar_lea.vmem [#allocation20], %s908
        %s910 = smul.u32 2, %s45
        %p911 = scmp.lt.s32.totalorder %s910, 3
        %s912 = scalar_select %p911, %s910, 3
        %s913 = smul.addr %s912, 8
        %s914 = scalar_lea.vmem %s1, %s913
        %s915 = smul.u32 2, %s45
        %p916 = scmp.lt.s32.totalorder %s45, 1
        %s917 = scalar_select %p916, %s45, 1
        %s918 = smul.addr %s917, 8
        %s919 = scalar_lea.vmem %s2, %s918
        %v920 = vld [vmem:[%s787] sm:$0xff]
        %v921 = vld [vmem:[%s914] sm:$0xff]
        %v922 = vld [vmem:[%s914 + $0x8] sm:$0xff]
        %v923 = vld [vmem:[%s919] sm:$0xff]
        %v924 = vld [vmem:[%s3] sm:$0xff]
        %v925 = vld [vmem:[%s3 + $0x8] sm:$0xff]
        %v926 = vld [vmem:[%s3 + $0x10] sm:$0xff]
        %v927 = vld [vmem:[%s3 + $0x18] sm:$0xff]
        %v928 = vld [vmem:[%s4] sm:$0x1]
        %v930 = vperm.slane %v928, 0
        %vm932 = vcmask 261120
        %v934 = vsel %vm932, %v920, 0
        %936 = vmatpush.msra.mxu0 0.0
        %937 = vmatpush.msra.mxu0 0.0
        %938 = vmatpush.msra.mxu0 0.0
        %939 = vmatpush.msra.mxu0 0.0
        %940 = vmatpush.msra.mxu0 0.0
        %941 = vmatpush.msra.mxu0 0.0
        %942 = vmatpush.msra.mxu0 0.0
        %943 = vmatpush.msra.mxu0 0.0
        %944 = vmatpush.msra.mxu0 0.0
        %945 = vmatpush.msra.mxu0 0.0
        %946 = vmatpush.msra.mxu0 0.0
        %947 = vmatpush.msra.mxu0 0.0
        %948 = vmatpush.msra.mxu0 %v927
        %949 = vmatpush.msra.mxu0 %v926
        %950 = vmatpush.msra.mxu0 %v925
        %951 = vmatpush.msra.mxu0 %v924
        %952 = vmatmul.f32.gmra.mxu0 %v934
        %v953 = vpop.f32.mrf.mxu0
        %v954 = vadd.f32 %v930, %v953
        %955 = vdwg.mxu0
        %957 = vrot.lane.b32.xlu0 %v954, 96
        %v958 = vpop.permute.xlu0 %957
        %vm959 = vcmask 64512
        %v960 = vsel %vm959, %v954, 0
        %v962 = vsel %vm959, %v958, 0
        %964 = vmatpush.xpose.msra.mxu0 0.0
        %965 = vmatpush.xpose.msra.mxu0 0.0
        %966 = vmatpush.xpose.msra.mxu0 0.0
        %967 = vmatpush.xpose.msra.mxu0 0.0
        %968 = vmatpush.xpose.msra.mxu0 0.0
        %969 = vmatpush.xpose.msra.mxu0 0.0
        %970 = vmatpush.xpose.msra.mxu0 0.0
        %971 = vmatpush.xpose.msra.mxu0 0.0
        %972 = vmatpush.xpose.msra.mxu0 0.0
        %973 = vmatpush.xpose.msra.mxu0 0.0
        %974 = vmatpush.xpose.msra.mxu0 0.0
        %975 = vmatpush.xpose.msra.mxu0 0.0
        %976 = vmatpush.xpose.msra.mxu0 0.0
        %977 = vmatpush.xpose.msra.mxu0 0.0
        %978 = vmatpush.xpose.msra.mxu0 0.0
        %979 = vmatpush.xpose.msra.mxu0 %v962
        %980 = vmatmul.f32.gmra.mxu0 %v960
        %v981 = vpop.f32.mrf.mxu0
        %v982 = vadd.f32 0.0, %v981
        %983 = vdwg.mxu0
        %v984 = vmul.f32 %v982, 0.35355338
        %v985 = vsel %vm959, %v984, -inf
        %986 = vmax.xlane.f32.xlu0 %v985
        %v987 = vpop.xlane.xlu0 %986
        %v988 = vsub.f32 %v984, %v987
        %v989 = vmul.f32 %v988, 1.442695
        %v990 = vpow.pop %v989
        %v991 = vsel %vm959, %v990, 0.0
        %992 = vadd.xlane.f32.xlu0 %v991
        %v993 = vpop.xlane.xlu0 %992
        %v994 = vrcp.pop %v993
        %v995 = vmul.f32 %v990, %v994
        %996 = vrot.lane.b32.xlu0 %v954, 64
        %v997 = vpop.permute.xlu0 %996
        %v1000 = vsel %vm959, %v995, 0
        %1002 = vmatpush.msra.mxu0 0.0
        %1003 = vmatpush.msra.mxu0 0.0
        %1004 = vmatpush.msra.mxu0 0.0
        %1005 = vmatpush.msra.mxu0 0.0
        %1006 = vmatpush.msra.mxu0 0.0
        %1007 = vmatpush.msra.mxu0 0.0
        %1008 = vmatpush.msra.mxu0 0.0
        %1009 = vmatpush.msra.mxu0 0.0
        %1010 = vmatpush.msra.mxu0 0.0
        %1011 = vmatpush.msra.mxu0 0.0
        %1012 = vmatpush.msra.mxu0 0.0
        %1013 = vmatpush.msra.mxu0 0.0
        %1014 = vmatpush.msra.mxu0 0.0
        %1015 = vmatpush.msra.mxu0 0.0
        %1016 = vmatpush.msra.mxu0 0.0
        %1017 = vmatpush.msra.mxu0 %v997
        %1018 = vmatmul.f32.gmra.mxu0 %v1000
        %v1019 = vpop.f32.mrf.mxu0
        %v1020 = vadd.f32 0.0, %v1019
        %1021 = vdwg.mxu0
        %1022 = vrot.lane.b32.xlu0 %v954, 120
        %v1023 = vpop.permute.xlu0 %1022
        %1024 = vrot.lane.b32.xlu0 %v954, 88
        %v1025 = vpop.permute.xlu0 %1024
        %v1026 = vsel %vm959, %v1023, 0
        %v1028 = vsel %vm959, %v1025, 0
        %1030 = vmatpush.xpose.msra.mxu0 0.0
        %1031 = vmatpush.xpose.msra.mxu0 0.0
        %1032 = vmatpush.xpose.msra.mxu0 0.0
        %1033 = vmatpush.xpose.msra.mxu0 0.0
        %1034 = vmatpush.xpose.msra.mxu0 0.0
        %1035 = vmatpush.xpose.msra.mxu0 0.0
        %1036 = vmatpush.xpose.msra.mxu0 0.0
        %1037 = vmatpush.xpose.msra.mxu0 0.0
        %1038 = vmatpush.xpose.msra.mxu0 0.0
        %1039 = vmatpush.xpose.msra.mxu0 0.0
        %1040 = vmatpush.xpose.msra.mxu0 0.0
        %1041 = vmatpush.xpose.msra.mxu0 0.0
        %1042 = vmatpush.xpose.msra.mxu0 0.0
        %1043 = vmatpush.xpose.msra.mxu0 0.0
        %1044 = vmatpush.xpose.msra.mxu0 0.0
        %1045 = vmatpush.xpose.msra.mxu0 %v1028
        %1046 = vmatmul.f32.gmra.mxu0 %v1026
        %v1047 = vpop.f32.mrf.mxu0
        %v1048 = vadd.f32 0.0, %v1047
        %1049 = vdwg.mxu0
        %v1050 = vmul.f32 %v1048, 0.35355338
        %v1051 = vsel %vm959, %v1050, -inf
        %1052 = vmax.xlane.f32.xlu0 %v1051
        %v1053 = vpop.xlane.xlu0 %1052
        %v1054 = vsub.f32 %v1050, %v1053
        %v1055 = vmul.f32 %v1054, 1.442695
        %v1056 = vpow.pop %v1055
        %v1057 = vsel %vm959, %v1056, 0.0
        %1058 = vadd.xlane.f32.xlu0 %v1057
        %v1059 = vpop.xlane.xlu0 %1058
        %v1060 = vrcp.pop %v1059
        %v1061 = vmul.f32 %v1056, %v1060
        %1062 = vrot.lane.b32.xlu0 %v954, 56
        %v1063 = vpop.permute.xlu0 %1062
        %v1066 = vsel %vm959, %v1061, 0
        %1068 = vmatpush.msra.mxu0 0.0
        %1069 = vmatpush.msra.mxu0 0.0
        %1070 = vmatpush.msra.mxu0 0.0
        %1071 = vmatpush.msra.mxu0 0.0
        %1072 = vmatpush.msra.mxu0 0.0
        %1073 = vmatpush.msra.mxu0 0.0
        %1074 = vmatpush.msra.mxu0 0.0
        %1075 = vmatpush.msra.mxu0 0.0
        %1076 = vmatpush.msra.mxu0 0.0
        %1077 = vmatpush.msra.mxu0 0.0
        %1078 = vmatpush.msra.mxu0 0.0
        %1079 = vmatpush.msra.mxu0 0.0
        %1080 = vmatpush.msra.mxu0 0.0
        %1081 = vmatpush.msra.mxu0 0.0
        %1082 = vmatpush.msra.mxu0 0.0
        %1083 = vmatpush.msra.mxu0 %v1063
        %1084 = vmatmul.f32.gmra.mxu0 %v1066
        %v1085 = vpop.f32.mrf.mxu0
        %v1086 = vadd.f32 0.0, %v1085
        %1087 = vdwg.mxu0
        %1088 = vrot.lane.b32.xlu0 %v954, 112
        %v1089 = vpop.permute.xlu0 %1088
        %1090 = vrot.lane.b32.xlu0 %v954, 80
        %v1091 = vpop.permute.xlu0 %1090
        %v1092 = vsel %vm959, %v1089, 0
        %v1094 = vsel %vm959, %v1091, 0
        %1096 = vmatpush.xpose.msra.mxu0 0.0
        %1097 = vmatpush.xpose.msra.mxu0 0.0
        %1098 = vmatpush.xpose.msra.mxu0 0.0
        %1099 = vmatpush.xpose.msra.mxu0 0.0
        %1100 = vmatpush.xpose.msra.mxu0 0.0
        %1101 = vmatpush.xpose.msra.mxu0 0.0
        %1102 = vmatpush.xpose.msra.mxu0 0.0
        %1103 = vmatpush.xpose.msra.mxu0 0.0
        %1104 = vmatpush.xpose.msra.mxu0 0.0
        %1105 = vmatpush.xpose.msra.mxu0 0.0
        %1106 = vmatpush.xpose.msra.mxu0 0.0
        %1107 = vmatpush.xpose.msra.mxu0 0.0
        %1108 = vmatpush.xpose.msra.mxu0 0.0
        %1109 = vmatpush.xpose.msra.mxu0 0.0
        %1110 = vmatpush.xpose.msra.mxu0 0.0
        %1111 = vmatpush.xpose.msra.mxu0 %v1094
        %1112 = vmatmul.f32.gmra.mxu0 %v1092
        %v1113 = vpop.f32.mrf.mxu0
        %v1114 = vadd.f32 0.0, %v1113
        %1115 = vdwg.mxu0
        %v1116 = vmul.f32 %v1114, 0.35355338
        %v1117 = vsel %vm959, %v1116, -inf
        %1118 = vmax.xlane.f32.xlu0 %v1117
        %v1119 = vpop.xlane.xlu0 %1118
        %v1120 = vsub.f32 %v1116, %v1119
        %v1121 = vmul.f32 %v1120, 1.442695
        %v1122 = vpow.pop %v1121
        %v1123 = vsel %vm959, %v1122, 0.0
        %1124 = vadd.xlane.f32.xlu0 %v1123
        %v1125 = vpop.xlane.xlu0 %1124
        %v1126 = vrcp.pop %v1125
        %v1127 = vmul.f32 %v1122, %v1126
        %1128 = vrot.lane.b32.xlu0 %v954, 48
        %v1129 = vpop.permute.xlu0 %1128
        %v1132 = vsel %vm959, %v1127, 0
        %1134 = vmatpush.msra.mxu0 0.0
        %1135 = vmatpush.msra.mxu0 0.0
        %1136 = vmatpush.msra.mxu0 0.0
        %1137 = vmatpush.msra.mxu0 0.0
        %1138 = vmatpush.msra.mxu0 0.0
        %1139 = vmatpush.msra.mxu0 0.0
        %1140 = vmatpush.msra.mxu0 0.0
        %1141 = vmatpush.msra.mxu0 0.0
        %1142 = vmatpush.msra.mxu0 0.0
        %1143 = vmatpush.msra.mxu0 0.0
        %1144 = vmatpush.msra.mxu0 0.0
        %1145 = vmatpush.msra.mxu0 0.0
        %1146 = vmatpush.msra.mxu0 0.0
        %1147 = vmatpush.msra.mxu0 0.0
        %1148 = vmatpush.msra.mxu0 0.0
        %1149 = vmatpush.msra.mxu0 %v1129
        %1150 = vmatmul.f32.gmra.mxu0 %v1132
        %v1151 = vpop.f32.mrf.mxu0
        %v1152 = vadd.f32 0.0, %v1151
        %1153 = vdwg.mxu0
        %1154 = vrot.lane.b32.xlu0 %v954, 104
        %v1155 = vpop.permute.xlu0 %1154
        %1156 = vrot.lane.b32.xlu0 %v954, 72
        %v1157 = vpop.permute.xlu0 %1156
        %v1158 = vsel %vm959, %v1155, 0
        %v1160 = vsel %vm959, %v1157, 0
        %1162 = vmatpush.xpose.msra.mxu0 0.0
        %1163 = vmatpush.xpose.msra.mxu0 0.0
        %1164 = vmatpush.xpose.msra.mxu0 0.0
        %1165 = vmatpush.xpose.msra.mxu0 0.0
        %1166 = vmatpush.xpose.msra.mxu0 0.0
        %1167 = vmatpush.xpose.msra.mxu0 0.0
        %1168 = vmatpush.xpose.msra.mxu0 0.0
        %1169 = vmatpush.xpose.msra.mxu0 0.0
        %1170 = vmatpush.xpose.msra.mxu0 0.0
        %1171 = vmatpush.xpose.msra.mxu0 0.0
        %1172 = vmatpush.xpose.msra.mxu0 0.0
        %1173 = vmatpush.xpose.msra.mxu0 0.0
        %1174 = vmatpush.xpose.msra.mxu0 0.0
        %1175 = vmatpush.xpose.msra.mxu0 0.0
        %1176 = vmatpush.xpose.msra.mxu0 0.0
        %1177 = vmatpush.xpose.msra.mxu0 %v1160
        %1178 = vmatmul.f32.gmra.mxu0 %v1158
        %v1179 = vpop.f32.mrf.mxu0
        %v1180 = vadd.f32 0.0, %v1179
        %1181 = vdwg.mxu0
        %v1182 = vmul.f32 %v1180, 0.35355338
        %v1183 = vsel %vm959, %v1182, -inf
        %1184 = vmax.xlane.f32.xlu0 %v1183
        %v1185 = vpop.xlane.xlu0 %1184
        %v1186 = vsub.f32 %v1182, %v1185
        %v1187 = vmul.f32 %v1186, 1.442695
        %v1188 = vpow.pop %v1187
        %v1189 = vsel %vm959, %v1188, 0.0
        %1190 = vadd.xlane.f32.xlu0 %v1189
        %v1191 = vpop.xlane.xlu0 %1190
        %v1192 = vrcp.pop %v1191
        %v1193 = vmul.f32 %v1188, %v1192
        %1194 = vrot.lane.b32.xlu0 %v954, 40
        %v1195 = vpop.permute.xlu0 %1194
        %v1198 = vsel %vm959, %v1193, 0
        %1200 = vmatpush.msra.mxu0 0.0
        %1201 = vmatpush.msra.mxu0 0.0
        %1202 = vmatpush.msra.mxu0 0.0
        %1203 = vmatpush.msra.mxu0 0.0
        %1204 = vmatpush.msra.mxu0 0.0
        %1205 = vmatpush.msra.mxu0 0.0
        %1206 = vmatpush.msra.mxu0 0.0
        %1207 = vmatpush.msra.mxu0 0.0
        %1208 = vmatpush.msra.mxu0 0.0
        %1209 = vmatpush.msra.mxu0 0.0
        %1210 = vmatpush.msra.mxu0 0.0
        %1211 = vmatpush.msra.mxu0 0.0
        %1212 = vmatpush.msra.mxu0 0.0
        %1213 = vmatpush.msra.mxu0 0.0
        %1214 = vmatpush.msra.mxu0 0.0
        %1215 = vmatpush.msra.mxu0 %v1195
        %1216 = vmatmul.f32.gmra.mxu0 %v1198
        %v1217 = vpop.f32.mrf.mxu0
        %v1218 = vadd.f32 0.0, %v1217
        %1219 = vdwg.mxu0
        %1221 = vrot.lane.b32.xlu0 %v1086, 8
        %v1222 = vpop.permute.xlu0 %1221
        %1225 = vrot.lane.b32.xlu0 %v1152, 16
        %v1226 = vpop.permute.xlu0 %1225
        %1229 = vrot.lane.b32.xlu0 %v1218, 24
        %v1230 = vpop.permute.xlu0 %1229
        %v1232 = vsel %vm959, %v1020, %v1222
        %vm1233 = vcmask 130048
        %v1234 = vsel %vm1233, %v1232, %v1226
        %vm1235 = vcmask 195584
        %v1236 = vsel %vm1235, %v1234, %v1230
        %v1237 = vld [vmem:[%s5] sm:$0xff]
        %v1238 = vld [vmem:[%s5 + $0x8] sm:$0xff]
        %v1239 = vld [vmem:[%s5 + $0x10] sm:$0xff]
        %v1240 = vld [vmem:[%s5 + $0x18] sm:$0xff]
        %v1241 = vld [vmem:[%s6] sm:$0x1]
        %v1243 = vperm.slane %v1241, 0
        %v1246 = vsel %vm932, %v1236, 0
        %1248 = vmatpush.msra.mxu0 0.0
        %1249 = vmatpush.msra.mxu0 0.0
        %1250 = vmatpush.msra.mxu0 0.0
        %1251 = vmatpush.msra.mxu0 0.0
        %1252 = vmatpush.msra.mxu0 0.0
        %1253 = vmatpush.msra.mxu0 0.0
        %1254 = vmatpush.msra.mxu0 0.0
        %1255 = vmatpush.msra.mxu0 0.0
        %1256 = vmatpush.msra.mxu0 0.0
        %1257 = vmatpush.msra.mxu0 0.0
        %1258 = vmatpush.msra.mxu0 0.0
        %1259 = vmatpush.msra.mxu0 0.0
        %1260 = vmatpush.msra.mxu0 %v1240
        %1261 = vmatpush.msra.mxu0 %v1239
        %1262 = vmatpush.msra.mxu0 %v1238
        %1263 = vmatpush.msra.mxu0 %v1237
        %1264 = vmatmul.f32.gmra.mxu0 %v1246
        %v1265 = vpop.f32.mrf.mxu0
        %v1266 = vadd.f32 %v1243, %v1265
        %1267 = vdwg.mxu0
        %v1268 = vadd.f32 %v1266, %v920
        %v1269 = vld [vmem:[%s7] sm:$0x1]
        %v1270 = vld [vmem:[%s8] sm:$0x1]
        %v1271 = vsel %vm932, %v1268, 0.0
        %1272 = vadd.xlane.f32.xlu0 %v1271
        %v1273 = vpop.xlane.xlu0 %1272
        %v1274 = vrcp.pop 32.0
        %v1275 = vmul.f32 32.0, %v1274
        %v1276 = vsub.f32 1.0, %v1275
        %v1277 = vmul.f32 %v1274, %v1276
        %v1278 = vadd.f32 %v1274, %v1277
        %vm1279 = vweird.f32 %v1274
        %v1280 = vsel %vm1279, %v1274, %v1278
        %v1281 = vmul.f32 %v1273, %v1280
        %v1282 = vsub.f32 %v1268, %v1281
        %v1283 = vmul.f32 %v1282, %v1282
        %v1284 = vsel %vm932, %v1283, 0.0
        %1285 = vadd.xlane.f32.xlu0 %v1284
        %v1286 = vpop.xlane.xlu0 %1285
        %v1287 = vmul.f32 %v1286, %v1280
        %v1288 = vadd.f32 %v1287, 1e-12
        %v1289 = vrsqrt.pop %v1288
        %v1290 = vmul.f32 %v1289, %v1288
        %v1291 = vmul.f32 %v1290, %v1289
        %v1292 = vmul.f32 0.5, %v1291
        %v1293 = vsub.f32 1.5, %v1292
        %v1294 = vmul.f32 %v1289, %v1293
        %vm1295 = vweird.f32 %v1288
        %vm1296 = vweird.f32 %v1289
        %vm1297 = vmor %vm1295, %vm1296
        %v1298 = vsel %vm1297, %v1289, %v1294
        %v1299 = vmul.f32 %v1282, %v1298
        %v1301 = vperm.slane %v1269, 0
        %v1303 = vmul.f32 %v1299, %v1301
        %v1305 = vperm.slane %v1270, 0
        %v1307 = vadd.f32 %v1303, %v1305
        %v1308 = vld [vmem:[#allocation5] sm:$0xff]
        %v1309 = vld [vmem:[#allocation5 + $0x8] sm:$0xff]
        %v1310 = vld [vmem:[#allocation5 + $0x10] sm:$0xff]
        %v1311 = vld [vmem:[#allocation5 + $0x18] sm:$0xff]
        %v1312 = vld [vmem:[%s10] sm:$0x1]
        %v1314 = vperm.slane %v1312, 0
        %v1317 = vsel %vm932, %v1307, 0
        %1319 = vmatpush.msra.mxu0 0.0
        %1320 = vmatpush.msra.mxu0 0.0
        %1321 = vmatpush.msra.mxu0 0.0
        %1322 = vmatpush.msra.mxu0 0.0
        %1323 = vmatpush.msra.mxu0 0.0
        %1324 = vmatpush.msra.mxu0 0.0
        %1325 = vmatpush.msra.mxu0 0.0
        %1326 = vmatpush.msra.mxu0 0.0
        %1327 = vmatpush.msra.mxu0 0.0
        %1328 = vmatpush.msra.mxu0 0.0
        %1329 = vmatpush.msra.mxu0 0.0
        %1330 = vmatpush.msra.mxu0 0.0
        %1331 = vmatpush.msra.mxu0 %v1311
        %1332 = vmatpush.msra.mxu0 %v1310
        %1333 = vmatpush.msra.mxu0 %v1309
        %1334 = vmatpush.msra.mxu0 %v1308
        %1335 = vmatmul.f32.gmra.mxu0 %v1317
        %v1336 = vpop.f32.mrf.mxu0
        %v1337 = vadd.f32 %v1314, %v1336
        %1338 = vdwg.mxu0
        %v1339 = vld [vmem:[#allocation7] sm:$0xff]
        %v1340 = vld [vmem:[#allocation7 + $0x8] sm:$0xff]
        %v1341 = vld [vmem:[#allocation7 + $0x10] sm:$0xff]
        %v1342 = vld [vmem:[#allocation7 + $0x18] sm:$0xff]
        %v1343 = vld [vmem:[%s12] sm:$0x1]
        %v1345 = vperm.slane %v1343, 0
        %v1348 = vsel %vm932, %v921, 0
        %v1351 = vsel %vm932, %v922, 0
        %1353 = vmatpush.msra.mxu0 0.0
        %1354 = vmatpush.msra.mxu0 0.0
        %1355 = vmatpush.msra.mxu0 0.0
        %1356 = vmatpush.msra.mxu0 0.0
        %1357 = vmatpush.msra.mxu0 0.0
        %1358 = vmatpush.msra.mxu0 0.0
        %1359 = vmatpush.msra.mxu0 0.0
        %1360 = vmatpush.msra.mxu0 0.0
        %1361 = vmatpush.msra.mxu0 0.0
        %1362 = vmatpush.msra.mxu0 0.0
        %1363 = vmatpush.msra.mxu0 0.0
        %1364 = vmatpush.msra.mxu0 0.0
        %1365 = vmatpush.msra.mxu0 %v1342
        %1366 = vmatpush.msra.mxu0 %v1341
        %1367 = vmatpush.msra.mxu0 %v1340
        %1368 = vmatpush.msra.mxu0 %v1339
        %1369 = vmatmul.f32.gmra.mxu0 %v1348
        %v1370 = vpop.f32.mrf.mxu0
        %v1371 = vadd.f32 %v1345, %v1370
        %1372 = vmatmul.f32.gmra.mxu0 %v1351
        %v1373 = vpop.f32.mrf.mxu0
        %v1374 = vadd.f32 %v1345, %v1373
        %1375 = vdwg.mxu0
        %v1377 = vsel %vm959, %v1337, 0
        %v1380 = vsel %vm959, %v1371, 0
        %v1383 = vsel %vm959, %v1374, 0
        %1385 = vmatpush.xpose.msra.mxu0 0.0
        %1386 = vmatpush.xpose.msra.mxu0 0.0
        %1387 = vmatpush.xpose.msra.mxu0 0.0
        %1388 = vmatpush.xpose.msra.mxu0 0.0
        %1389 = vmatpush.xpose.msra.mxu0 0.0
        %1390 = vmatpush.xpose.msra.mxu0 0.0
        %1391 = vmatpush.xpose.msra.mxu0 0.0
        %1392 = vmatpush.xpose.msra.mxu0 0.0
        %1393 = vmatpush.xpose.msra.mxu0 0.0
        %1394 = vmatpush.xpose.msra.mxu0 0.0
        %1395 = vmatpush.xpose.msra.mxu0 0.0
        %1396 = vmatpush.xpose.msra.mxu0 0.0
        %1397 = vmatpush.xpose.msra.mxu0 0.0
        %1398 = vmatpush.xpose.msra.mxu0 0.0
        %1399 = vmatpush.xpose.msra.mxu0 %v1383
        %1400 = vmatpush.xpose.msra.mxu0 %v1380
        %1401 = vmatmul.f32.gmra.mxu0 %v1377
        %v1402 = vpop.f32.mrf.mxu0
        %v1403 = vadd.f32 0.0, %v1402
        %1404 = vdwg.mxu0
        %v1405 = vmul.f32 %v1403, 0.35355338
        %v1406 = vadd.f32 %v1405, %v923
        %v1407 = vsel %vm1233, %v1406, -inf
        %1408 = vmax.xlane.f32.xlu0 %v1407
        %v1409 = vpop.xlane.xlu0 %1408
        %v1410 = vsub.f32 %v1406, %v1409
        %v1411 = vmul.f32 %v1410, 1.442695
        %v1412 = vpow.pop %v1411
        %v1413 = vsel %vm1233, %v1412, 0.0
        %1414 = vadd.xlane.f32.xlu0 %v1413
        %v1415 = vpop.xlane.xlu0 %1414
        %v1416 = vrcp.pop %v1415
        %v1417 = vmul.f32 %v1412, %v1416
        %1418 = vrot.lane.b32.xlu0 %v1371, 96
        %v1419 = vpop.permute.xlu0 %1418
        %1420 = vrot.lane.b32.xlu0 %v1374, 96
        %v1421 = vpop.permute.xlu0 %1420
        %v1425 = vsel %vm1233, %v1417, 0
        %1427 = vmatpush.msra.mxu0 0.0
        %1428 = vmatpush.msra.mxu0 0.0
        %1429 = vmatpush.msra.mxu0 0.0
        %1430 = vmatpush.msra.mxu0 0.0
        %1431 = vmatpush.msra.mxu0 0.0
        %1432 = vmatpush.msra.mxu0 0.0
        %1433 = vmatpush.msra.mxu0 0.0
        %1434 = vmatpush.msra.mxu0 0.0
        %1435 = vmatpush.msra.mxu0 0.0
        %1436 = vmatpush.msra.mxu0 0.0
        %1437 = vmatpush.msra.mxu0 0.0
        %1438 = vmatpush.msra.mxu0 0.0
        %1439 = vmatpush.msra.mxu0 0.0
        %1440 = vmatpush.msra.mxu0 0.0
        %1441 = vmatpush.msra.mxu0 %v1421
        %1442 = vmatpush.msra.mxu0 %v1419
        %1443 = vmatmul.f32.gmra.mxu0 %v1425
        %v1444 = vpop.f32.mrf.mxu0
        %v1445 = vadd.f32 0.0, %v1444
        %1446 = vdwg.mxu0
        %1447 = vrot.lane.b32.xlu0 %v1337, 120
        %v1448 = vpop.permute.xlu0 %1447
        %1449 = vrot.lane.b32.xlu0 %v1371, 120
        %v1450 = vpop.permute.xlu0 %1449
        %1451 = vrot.lane.b32.xlu0 %v1374, 120
        %v1452 = vpop.permute.xlu0 %1451
        %v1453 = vsel %vm959, %v1448, 0
        %v1455 = vsel %vm959, %v1450, 0
        %v1457 = vsel %vm959, %v1452, 0
        %1459 = vmatpush.xpose.msra.mxu0 0.0
        %1460 = vmatpush.xpose.msra.mxu0 0.0
        %1461 = vmatpush.xpose.msra.mxu0 0.0
        %1462 = vmatpush.xpose.msra.mxu0 0.0
        %1463 = vmatpush.xpose.msra.mxu0 0.0
        %1464 = vmatpush.xpose.msra.mxu0 0.0
        %1465 = vmatpush.xpose.msra.mxu0 0.0
        %1466 = vmatpush.xpose.msra.mxu0 0.0
        %1467 = vmatpush.xpose.msra.mxu0 0.0
        %1468 = vmatpush.xpose.msra.mxu0 0.0
        %1469 = vmatpush.xpose.msra.mxu0 0.0
        %1470 = vmatpush.xpose.msra.mxu0 0.0
        %1471 = vmatpush.xpose.msra.mxu0 0.0
        %1472 = vmatpush.xpose.msra.mxu0 0.0
        %1473 = vmatpush.xpose.msra.mxu0 %v1457
        %1474 = vmatpush.xpose.msra.mxu0 %v1455
        %1475 = vmatmul.f32.gmra.mxu0 %v1453
        %v1476 = vpop.f32.mrf.mxu0
        %v1477 = vadd.f32 0.0, %v1476
        %1478 = vdwg.mxu0
        %v1479 = vmul.f32 %v1477, 0.35355338
        %v1480 = vadd.f32 %v1479, %v923
        %v1481 = vsel %vm1233, %v1480, -inf
        %1482 = vmax.xlane.f32.xlu0 %v1481
        %v1483 = vpop.xlane.xlu0 %1482
        %v1484 = vsub.f32 %v1480, %v1483
        %v1485 = vmul.f32 %v1484, 1.442695
        %v1486 = vpow.pop %v1485
        %v1487 = vsel %vm1233, %v1486, 0.0
        %1488 = vadd.xlane.f32.xlu0 %v1487
        %v1489 = vpop.xlane.xlu0 %1488
        %v1490 = vrcp.pop %v1489
        %v1491 = vmul.f32 %v1486, %v1490
        %1492 = vrot.lane.b32.xlu0 %v1371, 88
        %v1493 = vpop.permute.xlu0 %1492
        %1494 = vrot.lane.b32.xlu0 %v1374, 88
        %v1495 = vpop.permute.xlu0 %1494
        %v1499 = vsel %vm1233, %v1491, 0
        %1501 = vmatpush.msra.mxu0 0.0
        %1502 = vmatpush.msra.mxu0 0.0
        %1503 = vmatpush.msra.mxu0 0.0
        %1504 = vmatpush.msra.mxu0 0.0
        %1505 = vmatpush.msra.mxu0 0.0
        %1506 = vmatpush.msra.mxu0 0.0
        %1507 = vmatpush.msra.mxu0 0.0
        %1508 = vmatpush.msra.mxu0 0.0
        %1509 = vmatpush.msra.mxu0 0.0
        %1510 = vmatpush.msra.mxu0 0.0
        %1511 = vmatpush.msra.mxu0 0.0
        %1512 = vmatpush.msra.mxu0 0.0
        %1513 = vmatpush.msra.mxu0 0.0
        %1514 = vmatpush.msra.mxu0 0.0
        %1515 = vmatpush.msra.mxu0 %v1495
        %1516 = vmatpush.msra.mxu0 %v1493
        %1517 = vmatmul.f32.gmra.mxu0 %v1499
        %v1518 = vpop.f32.mrf.mxu0
        %v1519 = vadd.f32 0.0, %v1518
        %1520 = vdwg.mxu0
        %1521 = vrot.lane.b32.xlu0 %v1337, 112
        %v1522 = vpop.permute.xlu0 %1521
        %1523 = vrot.lane.b32.xlu0 %v1371, 112
        %v1524 = vpop.permute.xlu0 %1523
        %1525 = vrot.lane.b32.xlu0 %v1374, 112
        %v1526 = vpop.permute.xlu0 %1525
        %v1527 = vsel %vm959, %v1522, 0
        %v1529 = vsel %vm959, %v1524, 0
        %v1531 = vsel %vm959, %v1526, 0
        %1533 = vmatpush.xpose.msra.mxu0 0.0
        %1534 = vmatpush.xpose.msra.mxu0 0.0
        %1535 = vmatpush.xpose.msra.mxu0 0.0
        %1536 = vmatpush.xpose.msra.mxu0 0.0
        %1537 = vmatpush.xpose.msra.mxu0 0.0
        %1538 = vmatpush.xpose.msra.mxu0 0.0
        %1539 = vmatpush.xpose.msra.mxu0 0.0
        %1540 = vmatpush.xpose.msra.mxu0 0.0
        %1541 = vmatpush.xpose.msra.mxu0 0.0
        %1542 = vmatpush.xpose.msra.mxu0 0.0
        %1543 = vmatpush.xpose.msra.mxu0 0.0
        %1544 = vmatpush.xpose.msra.mxu0 0.0
        %1545 = vmatpush.xpose.msra.mxu0 0.0
        %1546 = vmatpush.xpose.msra.mxu0 0.0
        %1547 = vmatpush.xpose.msra.mxu0 %v1531
        %1548 = vmatpush.xpose.msra.mxu0 %v1529
        %1549 = vmatmul.f32.gmra.mxu0 %v1527
        %v1550 = vpop.f32.mrf.mxu0
        %v1551 = vadd.f32 0.0, %v1550
        %1552 = vdwg.mxu0
        %v1553 = vmul.f32 %v1551, 0.35355338
        %v1554 = vadd.f32 %v1553, %v923
        %v1555 = vsel %vm1233, %v1554, -inf
        %1556 = vmax.xlane.f32.xlu0 %v1555
        %v1557 = vpop.xlane.xlu0 %1556
        %v1558 = vsub.f32 %v1554, %v1557
        %v1559 = vmul.f32 %v1558, 1.442695
        %v1560 = vpow.pop %v1559
        %v1561 = vsel %vm1233, %v1560, 0.0
        %1562 = vadd.xlane.f32.xlu0 %v1561
        %v1563 = vpop.xlane.xlu0 %1562
        %v1564 = vrcp.pop %v1563
        %v1565 = vmul.f32 %v1560, %v1564
        %1566 = vrot.lane.b32.xlu0 %v1371, 80
        %v1567 = vpop.permute.xlu0 %1566
        %1568 = vrot.lane.b32.xlu0 %v1374, 80
        %v1569 = vpop.permute.xlu0 %1568
        %v1573 = vsel %vm1233, %v1565, 0
        %1575 = vmatpush.msra.mxu0 0.0
        %1576 = vmatpush.msra.mxu0 0.0
        %1577 = vmatpush.msra.mxu0 0.0
        %1578 = vmatpush.msra.mxu0 0.0
        %1579 = vmatpush.msra.mxu0 0.0
        %1580 = vmatpush.msra.mxu0 0.0
        %1581 = vmatpush.msra.mxu0 0.0
        %1582 = vmatpush.msra.mxu0 0.0
        %1583 = vmatpush.msra.mxu0 0.0
        %1584 = vmatpush.msra.mxu0 0.0
        %1585 = vmatpush.msra.mxu0 0.0
        %1586 = vmatpush.msra.mxu0 0.0
        %1587 = vmatpush.msra.mxu0 0.0
        %1588 = vmatpush.msra.mxu0 0.0
        %1589 = vmatpush.msra.mxu0 %v1569
        %1590 = vmatpush.msra.mxu0 %v1567
        %1591 = vmatmul.f32.gmra.mxu0 %v1573
        %v1592 = vpop.f32.mrf.mxu0
        %v1593 = vadd.f32 0.0, %v1592
        %1594 = vdwg.mxu0
        %1595 = vrot.lane.b32.xlu0 %v1337, 104
        %v1596 = vpop.permute.xlu0 %1595
        %1597 = vrot.lane.b32.xlu0 %v1371, 104
        %v1598 = vpop.permute.xlu0 %1597
        %1599 = vrot.lane.b32.xlu0 %v1374, 104
        %v1600 = vpop.permute.xlu0 %1599
        %v1601 = vsel %vm959, %v1596, 0
        %v1603 = vsel %vm959, %v1598, 0
        %v1605 = vsel %vm959, %v1600, 0
        %1607 = vmatpush.xpose.msra.mxu0 0.0
        %1608 = vmatpush.xpose.msra.mxu0 0.0
        %1609 = vmatpush.xpose.msra.mxu0 0.0
        %1610 = vmatpush.xpose.msra.mxu0 0.0
        %1611 = vmatpush.xpose.msra.mxu0 0.0
        %1612 = vmatpush.xpose.msra.mxu0 0.0
        %1613 = vmatpush.xpose.msra.mxu0 0.0
        %1614 = vmatpush.xpose.msra.mxu0 0.0
        %1615 = vmatpush.xpose.msra.mxu0 0.0
        %1616 = vmatpush.xpose.msra.mxu0 0.0
        %1617 = vmatpush.xpose.msra.mxu0 0.0
        %1618 = vmatpush.xpose.msra.mxu0 0.0
        %1619 = vmatpush.xpose.msra.mxu0 0.0
        %1620 = vmatpush.xpose.msra.mxu0 0.0
        %1621 = vmatpush.xpose.msra.mxu0 %v1605
        %1622 = vmatpush.xpose.msra.mxu0 %v1603
        %1623 = vmatmul.f32.gmra.mxu0 %v1601
        %v1624 = vpop.f32.mrf.mxu0
        %v1625 = vadd.f32 0.0, %v1624
        %1626 = vdwg.mxu0
        %v1627 = vmul.f32 %v1625, 0.35355338
        %v1628 = vadd.f32 %v1627, %v923
        %v1629 = vsel %vm1233, %v1628, -inf
        %1630 = vmax.xlane.f32.xlu0 %v1629
        %v1631 = vpop.xlane.xlu0 %1630
        %v1632 = vsub.f32 %v1628, %v1631
        %v1633 = vmul.f32 %v1632, 1.442695
        %v1634 = vpow.pop %v1633
        %v1635 = vsel %vm1233, %v1634, 0.0
        %1636 = vadd.xlane.f32.xlu0 %v1635
        %v1637 = vpop.xlane.xlu0 %1636
        %v1638 = vrcp.pop %v1637
        %v1639 = vmul.f32 %v1634, %v1638
        %1640 = vrot.lane.b32.xlu0 %v1371, 72
        %v1641 = vpop.permute.xlu0 %1640
        %1642 = vrot.lane.b32.xlu0 %v1374, 72
        %v1643 = vpop.permute.xlu0 %1642
        %v1647 = vsel %vm1233, %v1639, 0
        %1649 = vmatpush.msra.mxu0 0.0
        %1650 = vmatpush.msra.mxu0 0.0
        %1651 = vmatpush.msra.mxu0 0.0
        %1652 = vmatpush.msra.mxu0 0.0
        %1653 = vmatpush.msra.mxu0 0.0
        %1654 = vmatpush.msra.mxu0 0.0
        %1655 = vmatpush.msra.mxu0 0.0
        %1656 = vmatpush.msra.mxu0 0.0
        %1657 = vmatpush.msra.mxu0 0.0
        %1658 = vmatpush.msra.mxu0 0.0
        %1659 = vmatpush.msra.mxu0 0.0
        %1660 = vmatpush.msra.mxu0 0.0
        %1661 = vmatpush.msra.mxu0 0.0
        %1662 = vmatpush.msra.mxu0 0.0
        %1663 = vmatpush.msra.mxu0 %v1643
        %1664 = vmatpush.msra.mxu0 %v1641
        %1665 = vmatmul.f32.gmra.mxu0 %v1647
        %v1666 = vpop.f32.mrf.mxu0
        %v1667 = vadd.f32 0.0, %v1666
        %1668 = vdwg.mxu0
        %1670 = vrot.lane.b32.xlu0 %v1519, 8
        %v1671 = vpop.permute.xlu0 %1670
        %1674 = vrot.lane.b32.xlu0 %v1593, 16
        %v1675 = vpop.permute.xlu0 %1674
        %1678 = vrot.lane.b32.xlu0 %v1667, 24
        %v1679 = vpop.permute.xlu0 %1678
        %v1681 = vsel %vm959, %v1445, %v1671
        %v1682 = vsel %vm1233, %v1681, %v1675
        %v1683 = vsel %vm1235, %v1682, %v1679
        %v1684 = vld [vmem:[#allocation8] sm:$0xff]
        %v1685 = vld [vmem:[#allocation8 + $0x8] sm:$0xff]
        %v1686 = vld [vmem:[#allocation8 + $0x10] sm:$0xff]
        %v1687 = vld [vmem:[#allocation8 + $0x18] sm:$0xff]
        %v1688 = vld [vmem:[%s14] sm:$0x1]
        %v1690 = vperm.slane %v1688, 0
        %v1693 = vsel %vm932, %v1683, 0
        %1695 = vmatpush.msra.mxu0 0.0
        %1696 = vmatpush.msra.mxu0 0.0
        %1697 = vmatpush.msra.mxu0 0.0
        %1698 = vmatpush.msra.mxu0 0.0
        %1699 = vmatpush.msra.mxu0 0.0
        %1700 = vmatpush.msra.mxu0 0.0
        %1701 = vmatpush.msra.mxu0 0.0
        %1702 = vmatpush.msra.mxu0 0.0
        %1703 = vmatpush.msra.mxu0 0.0
        %1704 = vmatpush.msra.mxu0 0.0
        %1705 = vmatpush.msra.mxu0 0.0
        %1706 = vmatpush.msra.mxu0 0.0
        %1707 = vmatpush.msra.mxu0 %v1687
        %1708 = vmatpush.msra.mxu0 %v1686
        %1709 = vmatpush.msra.mxu0 %v1685
        %1710 = vmatpush.msra.mxu0 %v1684
        %1711 = vmatmul.f32.gmra.mxu0 %v1693
        %v1712 = vpop.f32.mrf.mxu0
        %v1713 = vadd.f32 %v1690, %v1712
        %1714 = vdwg.mxu0
        %v1715 = vadd.f32 %v1713, %v1307
        %v1716 = vld [vmem:[#allocation10] sm:$0x1]
        %v1717 = vld [vmem:[#allocation11] sm:$0x1]
        %v1718 = vsel %vm932, %v1715, 0.0
        %1719 = vadd.xlane.f32.xlu0 %v1718
        %v1720 = vpop.xlane.xlu0 %1719
        %v1721 = vmul.f32 %v1720, %v1280
        %v1722 = vsub.f32 %v1715, %v1721
        %v1723 = vmul.f32 %v1722, %v1722
        %v1724 = vsel %vm932, %v1723, 0.0
        %1725 = vadd.xlane.f32.xlu0 %v1724
        %v1726 = vpop.xlane.xlu0 %1725
        %v1727 = vmul.f32 %v1726, %v1280
        %v1728 = vadd.f32 %v1727, 1e-12
        %v1729 = vrsqrt.pop %v1728
        %v1730 = vmul.f32 %v1729, %v1728
        %v1731 = vmul.f32 %v1730, %v1729
        %v1732 = vmul.f32 0.5, %v1731
        %v1733 = vsub.f32 1.5, %v1732
        %v1734 = vmul.f32 %v1729, %v1733
        %vm1735 = vweird.f32 %v1728
        %vm1736 = vweird.f32 %v1729
        %vm1737 = vmor %vm1735, %vm1736
        %v1738 = vsel %vm1737, %v1729, %v1734
        %v1739 = vmul.f32 %v1722, %v1738
        %v1741 = vperm.slane %v1716, 0
        %v1743 = vmul.f32 %v1739, %v1741
        %v1745 = vperm.slane %v1717, 0
        %v1747 = vadd.f32 %v1743, %v1745
        %v1748 = vld [vmem:[#allocation13] sm:$0xff]
        %v1749 = vld [vmem:[#allocation13 + $0x8] sm:$0xff]
        %v1750 = vld [vmem:[#allocation13 + $0x10] sm:$0xff]
        %v1751 = vld [vmem:[#allocation13 + $0x18] sm:$0xff]
        %v1752 = vld [vmem:[#allocation14] sm:$0x1]
        %v1754 = vperm.slane %v1752, 0
        %v1757 = vsel %vm932, %v1747, 0
        %1759 = vmatpush.msra.mxu0 0.0
        %1760 = vmatpush.msra.mxu0 0.0
        %1761 = vmatpush.msra.mxu0 0.0
        %1762 = vmatpush.msra.mxu0 0.0
        %1763 = vmatpush.msra.mxu0 0.0
        %1764 = vmatpush.msra.mxu0 0.0
        %1765 = vmatpush.msra.mxu0 0.0
        %1766 = vmatpush.msra.mxu0 0.0
        %1767 = vmatpush.msra.mxu0 0.0
        %1768 = vmatpush.msra.mxu0 0.0
        %1769 = vmatpush.msra.mxu0 0.0
        %1770 = vmatpush.msra.mxu0 0.0
        %1771 = vmatpush.msra.mxu0 %v1751
        %1772 = vmatpush.msra.mxu0 %v1750
        %1773 = vmatpush.msra.mxu0 %v1749
        %1774 = vmatpush.msra.mxu0 %v1748
        %1775 = vmatmul.f32.gmra.mxu0 %v1757
        %v1776 = vpop.f32.mrf.mxu0
        %v1777 = vadd.f32 %v1754, %v1776
        %1778 = vdwg.mxu0
        %v1779 = vmul.f32 %v1777, 0.70710677
        %vm1780 = vcmp.ge.f32.partialorder %v1779, 0.0
        %v1781 = vsel %vm1780, 1.0, -1.0
        %v1782 = vand.u32 2147483647, %v1779
        %v1783 = vmul.f32 %v1782, 0.3275911
        %v1784 = vadd.f32 %v1783, 1.0
        %v1785 = vrcp.pop %v1784
        %v1786 = vmul.f32 %v1784, %v1785
        %v1787 = vsub.f32 1.0, %v1786
        %v1788 = vmul.f32 %v1785, %v1787
        %v1789 = vadd.f32 %v1785, %v1788
        %vm1790 = vweird.f32 %v1784
        %vm1791 = vweird.f32 %v1785
        %vm1792 = vmor %vm1790, %vm1791
        %v1793 = vsel %vm1792, %v1785, %v1789
        %v1794 = vand.u32 2147483647, %v1784
        %vm1795 = vcmp.eq.f32.partialorder %v1794, 8.507059e+37
        %v1796 = vand.u32 %v1784, 2147483648
        %v1797 = vor.u32 1.1754944e-38, %v1796
        %v1798 = vsel %vm1795, %v1797, %v1793
        %v1799 = vmul.f32 1.0, %v1798
        %v1800 = vmul.f32 %v1799, 1.0614054
        %v1801 = vadd.f32 %v1800, -1.4531521
        %v1802 = vmul.f32 %v1799, %v1801
        %v1803 = vadd.f32 %v1802, 1.4214138
        %v1804 = vmul.f32 %v1799, %v1803
        %v1805 = vadd.f32 %v1804, -0.28449672
        %v1806 = vmul.f32 %v1799, %v1805
        %v1807 = vadd.f32 %v1806, 0.2548296
        %v1808 = vmul.f32 %v1799, %v1807
        %v1809 = vsub.f32 0.0, %v1782
        %v1810 = vmul.f32 %v1809, %v1782
        %v1811 = vmul.f32 %v1810, 1.442695
        %v1812 = vpow.pop %v1811
        %v1813 = vmul.f32 %v1808, %v1812
        %v1814 = vsub.f32 1.0, %v1813
        %v1815 = vmul.f32 %v1781, %v1814
        %v1816 = vmul.f32 %v1777, 0.5
        %v1817 = vadd.f32 %v1815, 1.0
        %v1818 = vmul.f32 %v1816, %v1817
        %v1819 = vld [vmem:[%s19] sm:$0xff]
        %v1820 = vld [vmem:[%s19 + $0x8] sm:$0xff]
        %v1821 = vld [vmem:[%s19 + $0x10] sm:$0xff]
        %v1822 = vld [vmem:[%s19 + $0x18] sm:$0xff]
        %v1823 = vld [vmem:[%s19 + $0x20] sm:$0xff]
        %v1824 = vld [vmem:[%s19 + $0x28] sm:$0xff]
        %v1825 = vld [vmem:[%s19 + $0x30] sm:$0xff]
        %v1826 = vld [vmem:[%s19 + $0x38] sm:$0xff]
        %v1827 = vld [vmem:[#allocation16] sm:$0x1]
        %v1829 = vperm.slane %v1827, 0
        %vm1831 = vcmask 523264
        %v1833 = vsel %vm1831, %v1818, 0
        %1835 = vmatpush.msra.mxu0 0.0
        %1836 = vmatpush.msra.mxu0 0.0
        %1837 = vmatpush.msra.mxu0 0.0
        %1838 = vmatpush.msra.mxu0 0.0
        %1839 = vmatpush.msra.mxu0 0.0
        %1840 = vmatpush.msra.mxu0 0.0
        %1841 = vmatpush.msra.mxu0 0.0
        %1842 = vmatpush.msra.mxu0 0.0
        %1843 = vmatpush.msra.mxu0 %v1826
        %1844 = vmatpush.msra.mxu0 %v1825
        %1845 = vmatpush.msra.mxu0 %v1824
        %1846 = vmatpush.msra.mxu0 %v1823
        %1847 = vmatpush.msra.mxu0 %v1822
        %1848 = vmatpush.msra.mxu0 %v1821
        %1849 = vmatpush.msra.mxu0 %v1820
        %1850 = vmatpush.msra.mxu0 %v1819
        %1851 = vmatmul.f32.gmra.mxu0 %v1833
        %v1852 = vpop.f32.mrf.mxu0
        %v1853 = vadd.f32 %v1829, %v1852
        %1854 = vdwg.mxu0
        %v1855 = vadd.f32 %v1853, %v1747
        %v1856 = vld [vmem:[#allocation17] sm:$0x1]
        %v1857 = vld [vmem:[#allocation19] sm:$0x1]
        %v1858 = vsel %vm932, %v1855, 0.0
        %1859 = vadd.xlane.f32.xlu0 %v1858
        %v1860 = vpop.xlane.xlu0 %1859
        %v1861 = vmul.f32 %v1860, %v1280
        %v1862 = vsub.f32 %v1855, %v1861
        %v1863 = vmul.f32 %v1862, %v1862
        %v1864 = vsel %vm932, %v1863, 0.0
        %1865 = vadd.xlane.f32.xlu0 %v1864
        %v1866 = vpop.xlane.xlu0 %1865
        %v1867 = vmul.f32 %v1866, %v1280
        %v1868 = vadd.f32 %v1867, 1e-12
        %v1869 = vrsqrt.pop %v1868
        %v1870 = vmul.f32 %v1869, %v1868
        %v1871 = vmul.f32 %v1870, %v1869
        %v1872 = vmul.f32 0.5, %v1871
        %v1873 = vsub.f32 1.5, %v1872
        %v1874 = vmul.f32 %v1869, %v1873
        %vm1875 = vweird.f32 %v1868
        %vm1876 = vweird.f32 %v1869
        %vm1877 = vmor %vm1875, %vm1876
        %v1878 = vsel %vm1877, %v1869, %v1874
        %v1879 = vmul.f32 %v1862, %v1878
        %v1881 = vperm.slane %v1856, 0
        %v1883 = vmul.f32 %v1879, %v1881
        %v1885 = vperm.slane %v1857, 0
        %v1887 = vadd.f32 %v1883, %v1885
        %1888 = vst.msk [vmem:[%s909] sm:$0xff] %vm932, %v1887
        %s1889 = sand.u32 %s551, 1
        %s1890 = scalar_lea.sflag [#allocation4], %s1889
        %s1891 = sand.u32 %s551, 1
        %s1892 = smul.addr %s1891, 8
        %s1893 = scalar_lea.vmem [#allocation20], %s1892
        // Predicated region
        $region157: #{decoder_layer.1} parent=111 // pred_check
          %p1894 = pneg %p561
        $region158: #{decoder_layer.1} parent=111 // pred_check_branch
          %1896 = sbr.rel (%p1894) target = $region160
        $region159: #{decoder_layer.1} parent=111 // pred_region
          %1898 = vsyncadd %s1890, 0
          %s1899 = smul.addr %s45, 8
          %s1900 = scalar_lea.hbm %s23, %s1899
          %s1902 = sshll.u32 %s1893, 4
          %s1903 = int_to_ptr.vmem [resolvable:$true] %s1902
          %s1904 = sshll.u32 %s1900, 4
          %s1905 = int_to_ptr.hbm [resolvable:$true] %s1904
          %1907 = dma.vmem_to_hbm [thread:$0]  %s1903, 128, %s1905, %s1890
        $region160: #{decoder_layer.1} parent=111 // pred_fallthru
          _
      $region112: #{decoder_layer.1} parent=5 // pred_fallthru
        _
      %p1908 = scmp.le.s32.totalorder 2, %s40
      // Predicated region
      $region161: #{decoder_layer.1} parent=5 // pred_check
        %p1909 = pneg %p1908
      $region162: #{decoder_layer.1} parent=5 // pred_check_branch
        %1911 = sbr.rel (%p1909) target = $region164
      $region163: #{decoder_layer.1} parent=5 // pred_region
        %s1912 = ssub.s32 %s40, 2
        // Predicated region
        $region165: #{decoder_layer.1} parent=163 // pred_check
          %p1913 = pneg %p567
        $region166: #{decoder_layer.1} parent=163 // pred_check_branch
          %1915 = sbr.rel (%p1913) target = $region168
        $region167: #{decoder_layer.1} parent=163 // pred_region
          %s1916 = sand.u32 %s552, 1
          %s1917 = scalar_lea.sflag [#allocation4], %s1916
          %s1918 = sand.u32 %s552, 1
          %s1919 = smul.addr %s1918, 8
          %s1920 = scalar_lea.vmem [#allocation20], %s1919
          %1922 = dma.done %s1917, 128
        $region168: #{decoder_layer.1} parent=163 // pred_fallthru
          _
      $region164: #{decoder_layer.1} parent=5 // pred_fallthru
        _
    $region6: #{decoder_layer.1} parent=1 // loop_footer
      %s44 = sadd.s32 1, %s40
    $region7: #{decoder_layer.1} parent=1 // loop_footer_branch
      %39 = sbr.rel target = $region3
    $region8: #{decoder_layer.1} parent=1 // loop_exit
      _
    %1923 = vsyncpa [#allocation3], 1
    %s1924 = scalar_lea.sflag [#allocation3], 1
    %1925 = vsyncpa %s1924, 1
    %1926 = vsyncpa [#allocation6], 1
    %1927 = vsyncpa [#allocation9], 1
    %1928 = vsyncpa [#allocation12], 1
    %1929 = vsyncpa [#allocation15], 1
    %1930 = vsyncpa [#allocation18], 1
    %1931 = vsyncpa [#allocation4], 1
    %s1932 = scalar_lea.sflag [#allocation4], 1
    %1933 = vsyncpa %s1932, 1

</llo_original>
